<compile_context>
chip_gen: v7x
topology: tpu7x:2x2x1
jax: 0.10.0
libtpu: 0.0.40
codegen_flags: <defaults>
</compile_context>

<pallas_src>
import functools
import math

import jax
import jax.numpy as jnp
from jax.experimental import pallas as pl
from jax.experimental.pallas import tpu as pltpu

# ----------------------------- config ---------------------------------------
VOCAB = 50
MAX_POS = 64
HIDDEN = 32
N_HEADS = 4
HEAD_DIM = HIDDEN // N_HEADS
N_LAYERS = 2
INTERMEDIATE = 64
CODE_LENGTH = 16
LN_EPS = 1e-12  # HF BertLayerNorm eps

# Weight-slab slot layout (each slot is a zero-padded (64, 128) bf16 block).
SLOTS_PER_LAYER = 3
S_QKV, S_WI, S_WO2 = 0, 1, 2
S_FC = SLOTS_PER_LAYER * N_LAYERS

# Small-parameter slab row layout (each row is one 128-lane f32 vector).
N_GLOBAL_ROWS = 3
ROW_EMB_G, ROW_EMB_B, ROW_FC_B = 0, 1, 2
ROWS_PER_LAYER = 8
R_QKV_B, R_BO, R_LN1_G, R_LN1_B, R_BI, R_BO2, R_LN2_G, R_LN2_B = range(8)


# ------------------------- fused Pallas kernel --------------------------------
def _layernorm(h, gamma, beta, eps):
    """LayerNorm over the last axis (biased variance, like torch), f32 math."""
    mean = jnp.mean(h, axis=-1, keepdims=True)
    var = jnp.mean(jnp.square(h - mean), axis=-1, keepdims=True)
    return (h - mean) * jax.lax.rsqrt(var + eps) * gamma + beta


def _textnet_kernel(x_ref, mask_ref, w_ref, wo_ref, p_ref, o_ref, *,
                    n_layers, n_heads, head_dim, hidden, inter, eps):
    def prow(r, width):
        # One packed small-parameter row -> (1, width) f32 (static ref slice).
        return p_ref[r:r + 1, 0:width]

    x = x_ref[...]                                       # (M, H) f32, M = B*S
    x = _layernorm(x, prow(ROW_EMB_G, hidden), prow(ROW_EMB_B, hidden), eps)
    # Additive mask (padding + cross-batch block-diagonal), pre-broadcast to
    # (n_heads, M, M) in the wrapper -> no broadcasts inside the layer loop.
    mask = mask_ref[...]

    for l in range(n_layers):                            # static unroll
        wbase = l * SLOTS_PER_LAYER
        pbase = N_GLOBAL_ROWS + l * ROWS_PER_LAYER

        # ------------------------- attention ---------------------------------
        xb = x.astype(jnp.bfloat16)
        qkv = jnp.dot(xb, w_ref[wbase + S_QKV, :hidden, :3 * hidden],
                      preferred_element_type=jnp.float32)
        qkv = qkv + prow(pbase + R_QKV_B, 3 * hidden)    # (M, 3H) f32

        # Stack per-head lane slices on a leading head axis once, then run the
        # whole attention as head-batched einsums (no per-head matmul loop).
        def heads(off):
            return jnp.stack(
                [qkv[:, off + h * head_dim: off + (h + 1) * head_dim]
                 for h in range(n_heads)], axis=0).astype(jnp.bfloat16)

        q = heads(0)                                     # (nH, M, d), Q pre-scaled
        k = heads(hidden)
        v = heads(2 * hidden)

        s = jnp.einsum("hmd,hnd->hmn", q, k,
                       preferred_element_type=jnp.float32) + mask
        s = s - jnp.max(s, axis=-1, keepdims=True)
        p = jnp.exp(s)
        p = p * pl.reciprocal(jnp.sum(p, axis=-1, keepdims=True), approx=True)
        ctx = jnp.einsum("hmn,hnd->hmd", p.astype(jnp.bfloat16), v,
                         preferred_element_type=jnp.float32)   # (nH, M, d)

        # Output projection: one head-batched einsum against the head-major
        # (nH, d, H) weight, then a leading-axis head reduction.
        attn = jnp.sum(
            jnp.einsum("hmd,hdo->hmo", ctx.astype(jnp.bfloat16), wo_ref[l],
                       preferred_element_type=jnp.float32), axis=0)
        x = _layernorm(x + attn + prow(pbase + R_BO, hidden),
                       prow(pbase + R_LN1_G, hidden),
                       prow(pbase + R_LN1_B, hidden), eps)

        # --------------------------- FFN --------------------------------------
        xb = x.astype(jnp.bfloat16)
        h1 = jnp.dot(xb, w_ref[wbase + S_WI, :hidden, :inter],
                     preferred_element_type=jnp.float32) + prow(pbase + R_BI, inter)
        # TODO(synk): HF BERT uses exact (erf) GELU; tanh-approx GELU used here.
        h1 = jax.nn.gelu(h1, approximate=True)
        h2 = jnp.dot(h1.astype(jnp.bfloat16), w_ref[wbase + S_WO2, :inter, :hidden],
                     preferred_element_type=jnp.float32) + prow(pbase + R_BO2, hidden)
        x = _layernorm(x + h2,
                       prow(pbase + R_LN2_G, hidden),
                       prow(pbase + R_LN2_B, hidden), eps)

    # fc + tanh on every row into a fully lane-dense (M, 128) block (unmasked
    # vst); the wrapper picks the CLS rows (0, S, 2S, ...) and the first
    # CODE_LENGTH lanes. No strided CLS gather inside the kernel.
    feat = jnp.tanh(jnp.dot(x.astype(jnp.bfloat16), w_ref[S_FC, :hidden, :],
                            preferred_element_type=jnp.float32)
                    + prow(ROW_FC_B, 128))
    o_ref[...] = feat


# --------------------------- parameters --------------------------------------
def init_params(key):
    def nrm(k, shape):
        return 0.02 * jax.random.normal(k, shape, dtype=jnp.float32)

    keys = jax.random.split(key, 8)
    L, H, I, C = N_LAYERS, HIDDEN, INTERMEDIATE, CODE_LENGTH
    return {
        "word_emb": nrm(keys[0], (VOCAB, H)),
        "pos_emb": nrm(keys[1], (MAX_POS, H)),
        "type_emb": nrm(keys[2], (2, H)),
        "emb_ln_g": jnp.ones((1, H), jnp.float32),
        "emb_ln_b": jnp.zeros((1, H), jnp.float32),
        "qkv_w": nrm(keys[3], (L, H, 3 * H)),   # columns = [q | k | v], head-major
        "qkv_b": jnp.zeros((L, 1, 3 * H), jnp.float32),
        "wo": nrm(keys[4], (L, H, H)),          # rows head-major
        "bo": jnp.zeros((L, 1, H), jnp.float32),
        "ln1_g": jnp.ones((L, 1, H), jnp.float32),
        "ln1_b": jnp.zeros((L, 1, H), jnp.float32),
        "wi": nrm(keys[5], (L, H, I)),
        "bi": jnp.zeros((L, 1, I), jnp.float32),
        "wo2": nrm(keys[6], (L, I, H)),
        "bo2": jnp.zeros((L, 1, H), jnp.float32),
        "ln2_g": jnp.ones((L, 1, H), jnp.float32),
        "ln2_b": jnp.zeros((L, 1, H), jnp.float32),
        "fc_w": nrm(keys[7], (H, C)),
        "fc_b": jnp.zeros((1, C), jnp.float32),
    }


def pack_params(p):
    """Pack logical params into the kernel's few-DMA layout (bf16 weights)."""
    L, H, I, C = N_LAYERS, HIDDEN, INTERMEDIATE, CODE_LENGTH
    nH, d = N_HEADS, HEAD_DIM

    # Fold the 1/sqrt(head_dim) attention scale into the Q columns (host-side
    # constant transform -> no per-layer score scaling in the kernel).
    scale = 1.0 / math.sqrt(d)
    qkv_w = p["qkv_w"].at[:, :, :H].multiply(scale)
    qkv_b = p["qkv_b"].at[:, :, :H].multiply(scale)

    # ---- bf16 weight slab: one DMA for every matmul weight -------------------
    wslab = jnp.zeros((SLOTS_PER_LAYER * L + 1, 64, 128), jnp.bfloat16)
    for l in range(L):
        b = l * SLOTS_PER_LAYER
        wslab = wslab.at[b + S_QKV, :H, :3 * H].set(qkv_w[l].astype(jnp.bfloat16))
        wslab = wslab.at[b + S_WI, :H, :I].set(p["wi"][l].astype(jnp.bfloat16))
        wslab = wslab.at[b + S_WO2, :I, :H].set(p["wo2"][l].astype(jnp.bfloat16))
    fc_pad = jnp.zeros((H, 128), jnp.float32).at[:, :C].set(p["fc_w"])
    wslab = wslab.at[S_FC, :H, :].set(fc_pad.astype(jnp.bfloat16))

    # Attention output projection stored head-major (L, nH, d, H) so the kernel
    # needs no in-kernel reshape for the heads-batched projection einsum.
    wo_heads = p["wo"].reshape(L, nH, d, H).astype(jnp.bfloat16)

    # ---- f32 small-parameter slab (biases + LayerNorm params): one DMA -------
    pslab = jnp.zeros((N_GLOBAL_ROWS + ROWS_PER_LAYER * L, 128), jnp.float32)
    pslab = pslab.at[ROW_EMB_G, :H].set(p["emb_ln_g"][0])
    pslab = pslab.at[ROW_EMB_B, :H].set(p["emb_ln_b"][0])
    pslab = pslab.at[ROW_FC_B, :C].set(p["fc_b"][0])
    for l in range(L):
        base = N_GLOBAL_ROWS + l * ROWS_PER_LAYER
        pslab = pslab.at[base + R_QKV_B, :3 * H].set(qkv_b[l, 0])
        pslab = pslab.at[base + R_BO, :H].set(p["bo"][l, 0])
        pslab = pslab.at[base + R_LN1_G, :H].set(p["ln1_g"][l, 0])
        pslab = pslab.at[base + R_LN1_B, :H].set(p["ln1_b"][l, 0])
        pslab = pslab.at[base + R_BI, :I].set(p["bi"][l, 0])
        pslab = pslab.at[base + R_BO2, :H].set(p["bo2"][l, 0])
        pslab = pslab.at[base + R_LN2_G, :H].set(p["ln2_g"][l, 0])
        pslab = pslab.at[base + R_LN2_B, :H].set(p["ln2_b"][l, 0])

    return {
        "word_emb": p["word_emb"], "pos_emb": p["pos_emb"], "type_emb": p["type_emb"],
        "wslab": wslab, "wo_heads": wo_heads, "pslab": pslab,
    }


# ---------------------------- forward ----------------------------------------
def textnet_forward(packed, tokens, segments, input_masks):
    B, S = tokens.shape
    M = B * S

    # Embedding lookup is a gather -> plain JAX glue outside the kernel.
    emb = (packed["word_emb"][tokens]
           + packed["pos_emb"][:S][None, :, :]
           + packed["type_emb"][segments])
    x = emb.reshape(M, HIDDEN).astype(jnp.float32)

    # Additive attention mask, fully materialized once (hoisted out of the
    # kernel): HF-style -10000 on padded keys plus a block-diagonal term so the
    # single fused (M x M) attention never mixes rows from different batches.
    key_add = ((1.0 - input_masks.astype(jnp.float32)) * -10000.0).reshape(M)
    row_b = jnp.arange(M, dtype=jnp.int32) // S
    cross = jnp.where(row_b[:, None] != row_b[None, :], -10000.0, 0.0)
    mask = jnp.broadcast_to((cross + key_add[None, :])[None],
                            (N_HEADS, M, M)).astype(jnp.float32)

    kernel = functools.partial(
        _textnet_kernel, n_layers=N_LAYERS, n_heads=N_HEADS, head_dim=HEAD_DIM,
        hidden=HIDDEN, inter=INTERMEDIATE, eps=LN_EPS)

    vmem = pl.BlockSpec(memory_space=pltpu.MemorySpace.VMEM)
    # TODO(synk): for real BERT-base shapes, add a "parallel" batch grid axis
    # (occupies v7x's 2nd TensorCore) and an "arbitrary" layer axis that streams
    # the per-layer weight slab via BlockSpec index_map (VMEM can't hold 12
    # resident layers at H=768); the toy config fits trivially in one launch.
    out = pl.pallas_call(
        kernel,
        out_shape=jax.ShapeDtypeStruct((M, 128), jnp.float32),
        in_specs=[vmem] * 5,
        out_specs=vmem,
    )(x, mask, packed["wslab"], packed["wo_heads"], packed["pslab"])

    # CLS rows sit at b*S in the batch-major layout; trim the lane padding.
    return out[0::S, :CODE_LENGTH]


# ------------------------------ main ------------------------------------------
if __name__ == "__main__":
    B, S = 2, 8
    root = jax.random.PRNGKey(0)
    k_par, k_tok, _ = jax.random.split(root, 3)

    packed = pack_params(init_params(k_par))
    tokens = jax.random.randint(k_tok, (B, S), 1, VOCAB, dtype=jnp.int32)
    tokens = tokens.at[:, 0].set(1)                            # CLS-like first token
    segments = jnp.zeros((B, S), dtype=jnp.int32).at[1, S // 2:].set(1)
    input_masks = jnp.ones((B, S), dtype=jnp.int32).at[1, S - 2:].set(0)  # padding

    fwd = jax.jit(functools.partial(textnet_forward, packed))
    features = fwd(tokens, segments, input_masks)
    jax.block_until_ready(features)

    assert features.shape == (B, CODE_LENGTH)
    assert bool(jnp.all(jnp.isfinite(features)))
    assert bool(jnp.all(jnp.abs(features) <= 1.0))             # tanh output range
    print("KERNEL_OK")
</pallas_src>

<mosaic_0001>
module attributes {stable_mosaic.version = 11 : i64} {
  func.func @_textnet_kernel(%arg0: memref<16x32xf32, #tpu.memory_space<vmem>>, %arg1: memref<4x16x16xf32, #tpu.memory_space<vmem>>, %arg2: memref<7x64x128xbf16, #tpu.memory_space<vmem>>, %arg3: memref<2x4x8x32xbf16, #tpu.memory_space<vmem>>, %arg4: memref<19x128xf32, #tpu.memory_space<vmem>>, %arg5: memref<16x128xf32, #tpu.memory_space<vmem>>) attributes {dimension_semantics = [], scalar_prefetch = 0 : i64, scratch_operands = 0 : i64, tpu.core_type = #tpu.core_type<tc>} {
    %c0 = arith.constant 0 : index
    %c0_0 = arith.constant 0 : index
    %0 = vector.load %arg0[%c0, %c0_0] : memref<16x32xf32, #tpu.memory_space<vmem>>, vector<16x32xf32>
    %c0_1 = arith.constant 0 : index
    %c0_2 = arith.constant 0 : index
    %1 = vector.load %arg4[%c0_1, %c0_2] : memref<19x128xf32, #tpu.memory_space<vmem>>, vector<1x32xf32>
    %c1 = arith.constant 1 : index
    %c0_3 = arith.constant 0 : index
    %2 = vector.load %arg4[%c1, %c0_3] : memref<19x128xf32, #tpu.memory_space<vmem>>, vector<1x32xf32>
    %cst = arith.constant dense<0.000000e+00> : vector<16xf32>
    %3 = vector.multi_reduction <add>, %0, %cst [1] : vector<16x32xf32> to vector<16xf32>
    %4 = vector.shape_cast %3 : vector<16xf32> to vector<16x1xf32>
    %cst_4 = arith.constant 3.200000e+01 : f32
    %5 = vector.broadcast %cst_4 : f32 to vector<16x1xf32>
    %6 = arith.divf %4, %5 : vector<16x1xf32>
    %7 = vector.broadcast %6 : vector<16x1xf32> to vector<16x32xf32>
    %8 = arith.subf %0, %7 : vector<16x32xf32>
    %9 = arith.mulf %8, %8 : vector<16x32xf32>
    %cst_5 = arith.constant dense<0.000000e+00> : vector<16xf32>
    %10 = vector.multi_reduction <add>, %9, %cst_5 [1] : vector<16x32xf32> to vector<16xf32>
    %11 = vector.shape_cast %10 : vector<16xf32> to vector<16x1xf32>
    %cst_6 = arith.constant 3.200000e+01 : f32
    %12 = vector.broadcast %cst_6 : f32 to vector<16x1xf32>
    %13 = arith.divf %11, %12 : vector<16x1xf32>
    %14 = vector.broadcast %6 : vector<16x1xf32> to vector<16x32xf32>
    %15 = arith.subf %0, %14 : vector<16x32xf32>
    %cst_7 = arith.constant 9.99999996E-13 : f32
    %16 = vector.broadcast %cst_7 : f32 to vector<16x1xf32>
    %17 = arith.addf %13, %16 : vector<16x1xf32>
    %18 = math.rsqrt %17 : vector<16x1xf32>
    %19 = vector.broadcast %18 : vector<16x1xf32> to vector<16x32xf32>
    %20 = arith.mulf %15, %19 : vector<16x32xf32>
    %21 = vector.broadcast %1 : vector<1x32xf32> to vector<16x32xf32>
    %22 = arith.mulf %20, %21 : vector<16x32xf32>
    %23 = vector.broadcast %2 : vector<1x32xf32> to vector<16x32xf32>
    %24 = arith.addf %22, %23 : vector<16x32xf32>
    %c0_8 = arith.constant 0 : index
    %c0_9 = arith.constant 0 : index
    %c0_10 = arith.constant 0 : index
    %25 = vector.load %arg1[%c0_8, %c0_9, %c0_10] : memref<4x16x16xf32, #tpu.memory_space<vmem>>, vector<4x16x16xf32>
    %26 = arith.truncf %24 : vector<16x32xf32> to vector<16x32xbf16>
    %c0_11 = arith.constant 0 : index
    %c0_12 = arith.constant 0 : index
    %c0_13 = arith.constant 0 : index
    %27 = vector.load %arg2[%c0_11, %c0_12, %c0_13] : memref<7x64x128xbf16, #tpu.memory_space<vmem>>, vector<1x32x96xbf16>
    %28 = vector.shape_cast %27 : vector<1x32x96xbf16> to vector<32x96xbf16>
    %cst_14 = arith.constant dense<0.000000e+00> : vector<16x96xf32>
    %29 = tpu.matmul %26, %28, %cst_14 {dimension_numbers = #tpu.dot_dimension_numbers<[1], [0], [0], [1], [0, 0, 1, 1], [], []>} : vector<16x32xbf16>, vector<32x96xbf16>, vector<16x96xf32> -> vector<16x96xf32>
    %c3 = arith.constant 3 : index
    %c0_15 = arith.constant 0 : index
    %30 = vector.load %arg4[%c3, %c0_15] : memref<19x128xf32, #tpu.memory_space<vmem>>, vector<1x96xf32>
    %31 = vector.broadcast %30 : vector<1x96xf32> to vector<16x96xf32>
    %32 = arith.addf %29, %31 : vector<16x96xf32>
    %33 = vector.extract_strided_slice %32 {offsets = [0, 0], sizes = [16, 8], strides = [1, 1]} : vector<16x96xf32> to vector<16x8xf32>
    %34 = vector.extract_strided_slice %32 {offsets = [0, 8], sizes = [16, 8], strides = [1, 1]} : vector<16x96xf32> to vector<16x8xf32>
    %35 = vector.extract_strided_slice %32 {offsets = [0, 16], sizes = [16, 8], strides = [1, 1]} : vector<16x96xf32> to vector<16x8xf32>
    %36 = vector.extract_strided_slice %32 {offsets = [0, 24], sizes = [16, 8], strides = [1, 1]} : vector<16x96xf32> to vector<16x8xf32>
    %37 = vector.shape_cast %33 : vector<16x8xf32> to vector<1x16x8xf32>
    %38 = vector.shape_cast %34 : vector<16x8xf32> to vector<1x16x8xf32>
    %39 = vector.shape_cast %35 : vector<16x8xf32> to vector<1x16x8xf32>
    %40 = vector.shape_cast %36 : vector<16x8xf32> to vector<1x16x8xf32>
    %41 = tpu.concatenate %37, %38, %39, %40 in 0 : vector<1x16x8xf32>, vector<1x16x8xf32>, vector<1x16x8xf32>, vector<1x16x8xf32> -> vector<4x16x8xf32>
    %42 = arith.truncf %41 : vector<4x16x8xf32> to vector<4x16x8xbf16>
    %43 = vector.extract_strided_slice %32 {offsets = [0, 32], sizes = [16, 8], strides = [1, 1]} : vector<16x96xf32> to vector<16x8xf32>
    %44 = vector.extract_strided_slice %32 {offsets = [0, 40], sizes = [16, 8], strides = [1, 1]} : vector<16x96xf32> to vector<16x8xf32>
    %45 = vector.extract_strided_slice %32 {offsets = [0, 48], sizes = [16, 8], strides = [1, 1]} : vector<16x96xf32> to vector<16x8xf32>
    %46 = vector.extract_strided_slice %32 {offsets = [0, 56], sizes = [16, 8], strides = [1, 1]} : vector<16x96xf32> to vector<16x8xf32>
    %47 = vector.shape_cast %43 : vector<16x8xf32> to vector<1x16x8xf32>
    %48 = vector.shape_cast %44 : vector<16x8xf32> to vector<1x16x8xf32>
    %49 = vector.shape_cast %45 : vector<16x8xf32> to vector<1x16x8xf32>
    %50 = vector.shape_cast %46 : vector<16x8xf32> to vector<1x16x8xf32>
    %51 = tpu.concatenate %47, %48, %49, %50 in 0 : vector<1x16x8xf32>, vector<1x16x8xf32>, vector<1x16x8xf32>, vector<1x16x8xf32> -> vector<4x16x8xf32>
    %52 = arith.truncf %51 : vector<4x16x8xf32> to vector<4x16x8xbf16>
    %53 = vector.extract_strided_slice %32 {offsets = [0, 64], sizes = [16, 8], strides = [1, 1]} : vector<16x96xf32> to vector<16x8xf32>
    %54 = vector.extract_strided_slice %32 {offsets = [0, 72], sizes = [16, 8], strides = [1, 1]} : vector<16x96xf32> to vector<16x8xf32>
    %55 = vector.extract_strided_slice %32 {offsets = [0, 80], sizes = [16, 8], strides = [1, 1]} : vector<16x96xf32> to vector<16x8xf32>
    %56 = vector.extract_strided_slice %32 {offsets = [0, 88], sizes = [16, 8], strides = [1, 1]} : vector<16x96xf32> to vector<16x8xf32>
    %57 = vector.shape_cast %53 : vector<16x8xf32> to vector<1x16x8xf32>
    %58 = vector.shape_cast %54 : vector<16x8xf32> to vector<1x16x8xf32>
    %59 = vector.shape_cast %55 : vector<16x8xf32> to vector<1x16x8xf32>
    %60 = vector.shape_cast %56 : vector<16x8xf32> to vector<1x16x8xf32>
    %61 = tpu.concatenate %57, %58, %59, %60 in 0 : vector<1x16x8xf32>, vector<1x16x8xf32>, vector<1x16x8xf32>, vector<1x16x8xf32> -> vector<4x16x8xf32>
    %62 = arith.truncf %61 : vector<4x16x8xf32> to vector<4x16x8xbf16>
    "tpu.trace_start"() <{level = 10 : i32, message = "hmd,hnd->hmn"}> : () -> ()
    %cst_16 = arith.constant dense<0.000000e+00> : vector<4x16x16xf32>
    %63 = tpu.matmul %42, %52, %cst_16 {dimension_numbers = #tpu.dot_dimension_numbers<[2], [2], [1], [1], [0, 0, 0, 1, 1, 1], [0], [0]>} : vector<4x16x8xbf16>, vector<4x16x8xbf16>, vector<4x16x16xf32> -> vector<4x16x16xf32>
    "tpu.trace_stop"() : () -> ()
    %64 = arith.addf %63, %25 : vector<4x16x16xf32>
    %cst_17 = arith.constant dense<0xFF800000> : vector<4x16xf32>
    %65 = vector.multi_reduction <maximumf>, %64, %cst_17 [2] : vector<4x16x16xf32> to vector<4x16xf32>
    %66 = vector.shape_cast %65 : vector<4x16xf32> to vector<4x16x1xf32>
    %67 = vector.broadcast %66 : vector<4x16x1xf32> to vector<4x16x16xf32>
    %68 = arith.subf %64, %67 : vector<4x16x16xf32>
    %69 = math.exp %68 : vector<4x16x16xf32>
    %cst_18 = arith.constant dense<0.000000e+00> : vector<4x16xf32>
    %70 = vector.multi_reduction <add>, %69, %cst_18 [2] : vector<4x16x16xf32> to vector<4x16xf32>
    %71 = vector.shape_cast %70 : vector<4x16xf32> to vector<4x16x1xf32>
    %72 = tpu.reciprocal %71 {approx = true} : vector<4x16x1xf32> -> vector<4x16x1xf32>
    %73 = vector.broadcast %72 : vector<4x16x1xf32> to vector<4x16x16xf32>
    %74 = arith.mulf %69, %73 : vector<4x16x16xf32>
    %75 = arith.truncf %74 : vector<4x16x16xf32> to vector<4x16x16xbf16>
    "tpu.trace_start"() <{level = 10 : i32, message = "hmn,hnd->hmd"}> : () -> ()
    %cst_19 = arith.constant dense<0.000000e+00> : vector<4x16x8xf32>
    %76 = tpu.matmul %75, %62, %cst_19 {dimension_numbers = #tpu.dot_dimension_numbers<[2], [1], [1], [2], [0, 0, 0, 1, 1, 2], [0], [0]>} : vector<4x16x16xbf16>, vector<4x16x8xbf16>, vector<4x16x8xf32> -> vector<4x16x8xf32>
    "tpu.trace_stop"() : () -> ()
    %77 = arith.truncf %76 : vector<4x16x8xf32> to vector<4x16x8xbf16>
    %c0_20 = arith.constant 0 : index
    %c0_21 = arith.constant 0 : index
    %c0_22 = arith.constant 0 : index
    %c0_23 = arith.constant 0 : index
    %78 = vector.load %arg3[%c0_20, %c0_21, %c0_22, %c0_23] : memref<2x4x8x32xbf16, #tpu.memory_space<vmem>>, vector<1x4x8x32xbf16>
    %79 = vector.shape_cast %78 : vector<1x4x8x32xbf16> to vector<4x8x32xbf16>
    "tpu.trace_start"() <{level = 10 : i32, message = "hmd,hdo->hmo"}> : () -> ()
    %cst_24 = arith.constant dense<0.000000e+00> : vector<4x16x32xf32>
    %80 = tpu.matmul %77, %79, %cst_24 {dimension_numbers = #tpu.dot_dimension_numbers<[2], [1], [1], [2], [0, 0, 0, 1, 1, 2], [0], [0]>} : vector<4x16x8xbf16>, vector<4x8x32xbf16>, vector<4x16x32xf32> -> vector<4x16x32xf32>
    "tpu.trace_stop"() : () -> ()
    %cst_25 = arith.constant dense<0.000000e+00> : vector<16x32xf32>
    %81 = vector.multi_reduction <add>, %80, %cst_25 [0] : vector<4x16x32xf32> to vector<16x32xf32>
    %82 = arith.addf %24, %81 : vector<16x32xf32>
    %c4 = arith.constant 4 : index
    %c0_26 = arith.constant 0 : index
    %83 = vector.load %arg4[%c4, %c0_26] : memref<19x128xf32, #tpu.memory_space<vmem>>, vector<1x32xf32>
    %84 = vector.broadcast %83 : vector<1x32xf32> to vector<16x32xf32>
    %85 = arith.addf %82, %84 : vector<16x32xf32>
    %c5 = arith.constant 5 : index
    %c0_27 = arith.constant 0 : index
    %86 = vector.load %arg4[%c5, %c0_27] : memref<19x128xf32, #tpu.memory_space<vmem>>, vector<1x32xf32>
    %c6 = arith.constant 6 : index
    %c0_28 = arith.constant 0 : index
    %87 = vector.load %arg4[%c6, %c0_28] : memref<19x128xf32, #tpu.memory_space<vmem>>, vector<1x32xf32>
    %cst_29 = arith.constant dense<0.000000e+00> : vector<16xf32>
    %88 = vector.multi_reduction <add>, %85, %cst_29 [1] : vector<16x32xf32> to vector<16xf32>
    %89 = vector.shape_cast %88 : vector<16xf32> to vector<16x1xf32>
    %cst_30 = arith.constant 3.200000e+01 : f32
    %90 = vector.broadcast %cst_30 : f32 to vector<16x1xf32>
    %91 = arith.divf %89, %90 : vector<16x1xf32>
    %92 = vector.broadcast %91 : vector<16x1xf32> to vector<16x32xf32>
    %93 = arith.subf %85, %92 : vector<16x32xf32>
    %94 = arith.mulf %93, %93 : vector<16x32xf32>
    %cst_31 = arith.constant dense<0.000000e+00> : vector<16xf32>
    %95 = vector.multi_reduction <add>, %94, %cst_31 [1] : vector<16x32xf32> to vector<16xf32>
    %96 = vector.shape_cast %95 : vector<16xf32> to vector<16x1xf32>
    %cst_32 = arith.constant 3.200000e+01 : f32
    %97 = vector.broadcast %cst_32 : f32 to vector<16x1xf32>
    %98 = arith.divf %96, %97 : vector<16x1xf32>
    %99 = vector.broadcast %91 : vector<16x1xf32> to vector<16x32xf32>
    %100 = arith.subf %85, %99 : vector<16x32xf32>
    %cst_33 = arith.constant 9.99999996E-13 : f32
    %101 = vector.broadcast %cst_33 : f32 to vector<16x1xf32>
    %102 = arith.addf %98, %101 : vector<16x1xf32>
    %103 = math.rsqrt %102 : vector<16x1xf32>
    %104 = vector.broadcast %103 : vector<16x1xf32> to vector<16x32xf32>
    %105 = arith.mulf %100, %104 : vector<16x32xf32>
    %106 = vector.broadcast %86 : vector<1x32xf32> to vector<16x32xf32>
    %107 = arith.mulf %105, %106 : vector<16x32xf32>
    %108 = vector.broadcast %87 : vector<1x32xf32> to vector<16x32xf32>
    %109 = arith.addf %107, %108 : vector<16x32xf32>
    %110 = arith.truncf %109 : vector<16x32xf32> to vector<16x32xbf16>
    %c1_34 = arith.constant 1 : index
    %c0_35 = arith.constant 0 : index
    %c0_36 = arith.constant 0 : index
    %111 = vector.load %arg2[%c1_34, %c0_35, %c0_36] : memref<7x64x128xbf16, #tpu.memory_space<vmem>>, vector<1x32x64xbf16>
    %112 = vector.shape_cast %111 : vector<1x32x64xbf16> to vector<32x64xbf16>
    %cst_37 = arith.constant dense<0.000000e+00> : vector<16x64xf32>
    %113 = tpu.matmul %110, %112, %cst_37 {dimension_numbers = #tpu.dot_dimension_numbers<[1], [0], [0], [1], [0, 0, 1, 1], [], []>} : vector<16x32xbf16>, vector<32x64xbf16>, vector<16x64xf32> -> vector<16x64xf32>
    %c7 = arith.constant 7 : index
    %c0_38 = arith.constant 0 : index
    %114 = vector.load %arg4[%c7, %c0_38] : memref<19x128xf32, #tpu.memory_space<vmem>>, vector<1x64xf32>
    %115 = vector.broadcast %114 : vector<1x64xf32> to vector<16x64xf32>
    %116 = arith.addf %113, %115 : vector<16x64xf32>
    %117 = arith.mulf %116, %116 : vector<16x64xf32>
    %118 = arith.mulf %116, %117 : vector<16x64xf32>
    %cst_39 = arith.constant 4.471500e-02 : f32
    %119 = vector.broadcast %cst_39 : f32 to vector<16x64xf32>
    %120 = arith.mulf %119, %118 : vector<16x64xf32>
    %121 = arith.addf %116, %120 : vector<16x64xf32>
    %cst_40 = arith.constant 0.797884583 : f32
    %122 = vector.broadcast %cst_40 : f32 to vector<16x64xf32>
    %123 = arith.mulf %122, %121 : vector<16x64xf32>
    %124 = math.tanh %123 : vector<16x64xf32>
    %cst_41 = arith.constant 1.000000e+00 : f32
    %125 = vector.broadcast %cst_41 : f32 to vector<16x64xf32>
    %126 = arith.addf %125, %124 : vector<16x64xf32>
    %cst_42 = arith.constant 5.000000e-01 : f32
    %127 = vector.broadcast %cst_42 : f32 to vector<16x64xf32>
    %128 = arith.mulf %127, %126 : vector<16x64xf32>
    %129 = arith.mulf %116, %128 : vector<16x64xf32>
    %130 = arith.truncf %129 : vector<16x64xf32> to vector<16x64xbf16>
    %c2 = arith.constant 2 : index
    %c0_43 = arith.constant 0 : index
    %c0_44 = arith.constant 0 : index
    %131 = vector.load %arg2[%c2, %c0_43, %c0_44] : memref<7x64x128xbf16, #tpu.memory_space<vmem>>, vector<1x64x32xbf16>
    %132 = vector.shape_cast %131 : vector<1x64x32xbf16> to vector<64x32xbf16>
    %cst_45 = arith.constant dense<0.000000e+00> : vector<16x32xf32>
    %133 = tpu.matmul %130, %132, %cst_45 {dimension_numbers = #tpu.dot_dimension_numbers<[1], [0], [0], [1], [0, 0, 1, 1], [], []>} : vector<16x64xbf16>, vector<64x32xbf16>, vector<16x32xf32> -> vector<16x32xf32>
    %c8 = arith.constant 8 : index
    %c0_46 = arith.constant 0 : index
    %134 = vector.load %arg4[%c8, %c0_46] : memref<19x128xf32, #tpu.memory_space<vmem>>, vector<1x32xf32>
    %135 = vector.broadcast %134 : vector<1x32xf32> to vector<16x32xf32>
    %136 = arith.addf %133, %135 : vector<16x32xf32>
    %137 = arith.addf %109, %136 : vector<16x32xf32>
    %c9 = arith.constant 9 : index
    %c0_47 = arith.constant 0 : index
    %138 = vector.load %arg4[%c9, %c0_47] : memref<19x128xf32, #tpu.memory_space<vmem>>, vector<1x32xf32>
    %c10 = arith.constant 10 : index
    %c0_48 = arith.constant 0 : index
    %139 = vector.load %arg4[%c10, %c0_48] : memref<19x128xf32, #tpu.memory_space<vmem>>, vector<1x32xf32>
    %cst_49 = arith.constant dense<0.000000e+00> : vector<16xf32>
    %140 = vector.multi_reduction <add>, %137, %cst_49 [1] : vector<16x32xf32> to vector<16xf32>
    %141 = vector.shape_cast %140 : vector<16xf32> to vector<16x1xf32>
    %cst_50 = arith.constant 3.200000e+01 : f32
    %142 = vector.broadcast %cst_50 : f32 to vector<16x1xf32>
    %143 = arith.divf %141, %142 : vector<16x1xf32>
    %144 = vector.broadcast %143 : vector<16x1xf32> to vector<16x32xf32>
    %145 = arith.subf %137, %144 : vector<16x32xf32>
    %146 = arith.mulf %145, %145 : vector<16x32xf32>
    %cst_51 = arith.constant dense<0.000000e+00> : vector<16xf32>
    %147 = vector.multi_reduction <add>, %146, %cst_51 [1] : vector<16x32xf32> to vector<16xf32>
    %148 = vector.shape_cast %147 : vector<16xf32> to vector<16x1xf32>
    %cst_52 = arith.constant 3.200000e+01 : f32
    %149 = vector.broadcast %cst_52 : f32 to vector<16x1xf32>
    %150 = arith.divf %148, %149 : vector<16x1xf32>
    %151 = vector.broadcast %143 : vector<16x1xf32> to vector<16x32xf32>
    %152 = arith.subf %137, %151 : vector<16x32xf32>
    %cst_53 = arith.constant 9.99999996E-13 : f32
    %153 = vector.broadcast %cst_53 : f32 to vector<16x1xf32>
    %154 = arith.addf %150, %153 : vector<16x1xf32>
    %155 = math.rsqrt %154 : vector<16x1xf32>
    %156 = vector.broadcast %155 : vector<16x1xf32> to vector<16x32xf32>
    %157 = arith.mulf %152, %156 : vector<16x32xf32>
    %158 = vector.broadcast %138 : vector<1x32xf32> to vector<16x32xf32>
    %159 = arith.mulf %157, %158 : vector<16x32xf32>
    %160 = vector.broadcast %139 : vector<1x32xf32> to vector<16x32xf32>
    %161 = arith.addf %159, %160 : vector<16x32xf32>
    %162 = arith.truncf %161 : vector<16x32xf32> to vector<16x32xbf16>
    %c3_54 = arith.constant 3 : index
    %c0_55 = arith.constant 0 : index
    %c0_56 = arith.constant 0 : index
    %163 = vector.load %arg2[%c3_54, %c0_55, %c0_56] : memref<7x64x128xbf16, #tpu.memory_space<vmem>>, vector<1x32x96xbf16>
    %164 = vector.shape_cast %163 : vector<1x32x96xbf16> to vector<32x96xbf16>
    %cst_57 = arith.constant dense<0.000000e+00> : vector<16x96xf32>
    %165 = tpu.matmul %162, %164, %cst_57 {dimension_numbers = #tpu.dot_dimension_numbers<[1], [0], [0], [1], [0, 0, 1, 1], [], []>} : vector<16x32xbf16>, vector<32x96xbf16>, vector<16x96xf32> -> vector<16x96xf32>
    %c11 = arith.constant 11 : index
    %c0_58 = arith.constant 0 : index
    %166 = vector.load %arg4[%c11, %c0_58] : memref<19x128xf32, #tpu.memory_space<vmem>>, vector<1x96xf32>
    %167 = vector.broadcast %166 : vector<1x96xf32> to vector<16x96xf32>
    %168 = arith.addf %165, %167 : vector<16x96xf32>
    %169 = vector.extract_strided_slice %168 {offsets = [0, 0], sizes = [16, 8], strides = [1, 1]} : vector<16x96xf32> to vector<16x8xf32>
    %170 = vector.extract_strided_slice %168 {offsets = [0, 8], sizes = [16, 8], strides = [1, 1]} : vector<16x96xf32> to vector<16x8xf32>
    %171 = vector.extract_strided_slice %168 {offsets = [0, 16], sizes = [16, 8], strides = [1, 1]} : vector<16x96xf32> to vector<16x8xf32>
    %172 = vector.extract_strided_slice %168 {offsets = [0, 24], sizes = [16, 8], strides = [1, 1]} : vector<16x96xf32> to vector<16x8xf32>
    %173 = vector.shape_cast %169 : vector<16x8xf32> to vector<1x16x8xf32>
    %174 = vector.shape_cast %170 : vector<16x8xf32> to vector<1x16x8xf32>
    %175 = vector.shape_cast %171 : vector<16x8xf32> to vector<1x16x8xf32>
    %176 = vector.shape_cast %172 : vector<16x8xf32> to vector<1x16x8xf32>
    %177 = tpu.concatenate %173, %174, %175, %176 in 0 : vector<1x16x8xf32>, vector<1x16x8xf32>, vector<1x16x8xf32>, vector<1x16x8xf32> -> vector<4x16x8xf32>
    %178 = arith.truncf %177 : vector<4x16x8xf32> to vector<4x16x8xbf16>
    %179 = vector.extract_strided_slice %168 {offsets = [0, 32], sizes = [16, 8], strides = [1, 1]} : vector<16x96xf32> to vector<16x8xf32>
    %180 = vector.extract_strided_slice %168 {offsets = [0, 40], sizes = [16, 8], strides = [1, 1]} : vector<16x96xf32> to vector<16x8xf32>
    %181 = vector.extract_strided_slice %168 {offsets = [0, 48], sizes = [16, 8], strides = [1, 1]} : vector<16x96xf32> to vector<16x8xf32>
    %182 = vector.extract_strided_slice %168 {offsets = [0, 56], sizes = [16, 8], strides = [1, 1]} : vector<16x96xf32> to vector<16x8xf32>
    %183 = vector.shape_cast %179 : vector<16x8xf32> to vector<1x16x8xf32>
    %184 = vector.shape_cast %180 : vector<16x8xf32> to vector<1x16x8xf32>
    %185 = vector.shape_cast %181 : vector<16x8xf32> to vector<1x16x8xf32>
    %186 = vector.shape_cast %182 : vector<16x8xf32> to vector<1x16x8xf32>
    %187 = tpu.concatenate %183, %184, %185, %186 in 0 : vector<1x16x8xf32>, vector<1x16x8xf32>, vector<1x16x8xf32>, vector<1x16x8xf32> -> vector<4x16x8xf32>
    %188 = arith.truncf %187 : vector<4x16x8xf32> to vector<4x16x8xbf16>
    %189 = vector.extract_strided_slice %168 {offsets = [0, 64], sizes = [16, 8], strides = [1, 1]} : vector<16x96xf32> to vector<16x8xf32>
    %190 = vector.extract_strided_slice %168 {offsets = [0, 72], sizes = [16, 8], strides = [1, 1]} : vector<16x96xf32> to vector<16x8xf32>
    %191 = vector.extract_strided_slice %168 {offsets = [0, 80], sizes = [16, 8], strides = [1, 1]} : vector<16x96xf32> to vector<16x8xf32>
    %192 = vector.extract_strided_slice %168 {offsets = [0, 88], sizes = [16, 8], strides = [1, 1]} : vector<16x96xf32> to vector<16x8xf32>
    %193 = vector.shape_cast %189 : vector<16x8xf32> to vector<1x16x8xf32>
    %194 = vector.shape_cast %190 : vector<16x8xf32> to vector<1x16x8xf32>
    %195 = vector.shape_cast %191 : vector<16x8xf32> to vector<1x16x8xf32>
    %196 = vector.shape_cast %192 : vector<16x8xf32> to vector<1x16x8xf32>
    %197 = tpu.concatenate %193, %194, %195, %196 in 0 : vector<1x16x8xf32>, vector<1x16x8xf32>, vector<1x16x8xf32>, vector<1x16x8xf32> -> vector<4x16x8xf32>
    %198 = arith.truncf %197 : vector<4x16x8xf32> to vector<4x16x8xbf16>
    "tpu.trace_start"() <{level = 10 : i32, message = "hmd,hnd->hmn"}> : () -> ()
    %cst_59 = arith.constant dense<0.000000e+00> : vector<4x16x16xf32>
    %199 = tpu.matmul %178, %188, %cst_59 {dimension_numbers = #tpu.dot_dimension_numbers<[2], [2], [1], [1], [0, 0, 0, 1, 1, 1], [0], [0]>} : vector<4x16x8xbf16>, vector<4x16x8xbf16>, vector<4x16x16xf32> -> vector<4x16x16xf32>
    "tpu.trace_stop"() : () -> ()
    %200 = arith.addf %199, %25 : vector<4x16x16xf32>
    %cst_60 = arith.constant dense<0xFF800000> : vector<4x16xf32>
    %201 = vector.multi_reduction <maximumf>, %200, %cst_60 [2] : vector<4x16x16xf32> to vector<4x16xf32>
    %202 = vector.shape_cast %201 : vector<4x16xf32> to vector<4x16x1xf32>
    %203 = vector.broadcast %202 : vector<4x16x1xf32> to vector<4x16x16xf32>
    %204 = arith.subf %200, %203 : vector<4x16x16xf32>
    %205 = math.exp %204 : vector<4x16x16xf32>
    %cst_61 = arith.constant dense<0.000000e+00> : vector<4x16xf32>
    %206 = vector.multi_reduction <add>, %205, %cst_61 [2] : vector<4x16x16xf32> to vector<4x16xf32>
    %207 = vector.shape_cast %206 : vector<4x16xf32> to vector<4x16x1xf32>
    %208 = tpu.reciprocal %207 {approx = true} : vector<4x16x1xf32> -> vector<4x16x1xf32>
    %209 = vector.broadcast %208 : vector<4x16x1xf32> to vector<4x16x16xf32>
    %210 = arith.mulf %205, %209 : vector<4x16x16xf32>
    %211 = arith.truncf %210 : vector<4x16x16xf32> to vector<4x16x16xbf16>
    "tpu.trace_start"() <{level = 10 : i32, message = "hmn,hnd->hmd"}> : () -> ()
    %cst_62 = arith.constant dense<0.000000e+00> : vector<4x16x8xf32>
    %212 = tpu.matmul %211, %198, %cst_62 {dimension_numbers = #tpu.dot_dimension_numbers<[2], [1], [1], [2], [0, 0, 0, 1, 1, 2], [0], [0]>} : vector<4x16x16xbf16>, vector<4x16x8xbf16>, vector<4x16x8xf32> -> vector<4x16x8xf32>
    "tpu.trace_stop"() : () -> ()
    %213 = arith.truncf %212 : vector<4x16x8xf32> to vector<4x16x8xbf16>
    %c1_63 = arith.constant 1 : index
    %c0_64 = arith.constant 0 : index
    %c0_65 = arith.constant 0 : index
    %c0_66 = arith.constant 0 : index
    %214 = vector.load %arg3[%c1_63, %c0_64, %c0_65, %c0_66] : memref<2x4x8x32xbf16, #tpu.memory_space<vmem>>, vector<1x4x8x32xbf16>
    %215 = vector.shape_cast %214 : vector<1x4x8x32xbf16> to vector<4x8x32xbf16>
    "tpu.trace_start"() <{level = 10 : i32, message = "hmd,hdo->hmo"}> : () -> ()
    %cst_67 = arith.constant dense<0.000000e+00> : vector<4x16x32xf32>
    %216 = tpu.matmul %213, %215, %cst_67 {dimension_numbers = #tpu.dot_dimension_numbers<[2], [1], [1], [2], [0, 0, 0, 1, 1, 2], [0], [0]>} : vector<4x16x8xbf16>, vector<4x8x32xbf16>, vector<4x16x32xf32> -> vector<4x16x32xf32>
    "tpu.trace_stop"() : () -> ()
    %cst_68 = arith.constant dense<0.000000e+00> : vector<16x32xf32>
    %217 = vector.multi_reduction <add>, %216, %cst_68 [0] : vector<4x16x32xf32> to vector<16x32xf32>
    %218 = arith.addf %161, %217 : vector<16x32xf32>
    %c12 = arith.constant 12 : index
    %c0_69 = arith.constant 0 : index
    %219 = vector.load %arg4[%c12, %c0_69] : memref<19x128xf32, #tpu.memory_space<vmem>>, vector<1x32xf32>
    %220 = vector.broadcast %219 : vector<1x32xf32> to vector<16x32xf32>
    %221 = arith.addf %218, %220 : vector<16x32xf32>
    %c13 = arith.constant 13 : index
    %c0_70 = arith.constant 0 : index
    %222 = vector.load %arg4[%c13, %c0_70] : memref<19x128xf32, #tpu.memory_space<vmem>>, vector<1x32xf32>
    %c14 = arith.constant 14 : index
    %c0_71 = arith.constant 0 : index
    %223 = vector.load %arg4[%c14, %c0_71] : memref<19x128xf32, #tpu.memory_space<vmem>>, vector<1x32xf32>
    %cst_72 = arith.constant dense<0.000000e+00> : vector<16xf32>
    %224 = vector.multi_reduction <add>, %221, %cst_72 [1] : vector<16x32xf32> to vector<16xf32>
    %225 = vector.shape_cast %224 : vector<16xf32> to vector<16x1xf32>
    %cst_73 = arith.constant 3.200000e+01 : f32
    %226 = vector.broadcast %cst_73 : f32 to vector<16x1xf32>
    %227 = arith.divf %225, %226 : vector<16x1xf32>
    %228 = vector.broadcast %227 : vector<16x1xf32> to vector<16x32xf32>
    %229 = arith.subf %221, %228 : vector<16x32xf32>
    %230 = arith.mulf %229, %229 : vector<16x32xf32>
    %cst_74 = arith.constant dense<0.000000e+00> : vector<16xf32>
    %231 = vector.multi_reduction <add>, %230, %cst_74 [1] : vector<16x32xf32> to vector<16xf32>
    %232 = vector.shape_cast %231 : vector<16xf32> to vector<16x1xf32>
    %cst_75 = arith.constant 3.200000e+01 : f32
    %233 = vector.broadcast %cst_75 : f32 to vector<16x1xf32>
    %234 = arith.divf %232, %233 : vector<16x1xf32>
    %235 = vector.broadcast %227 : vector<16x1xf32> to vector<16x32xf32>
    %236 = arith.subf %221, %235 : vector<16x32xf32>
    %cst_76 = arith.constant 9.99999996E-13 : f32
    %237 = vector.broadcast %cst_76 : f32 to vector<16x1xf32>
    %238 = arith.addf %234, %237 : vector<16x1xf32>
    %239 = math.rsqrt %238 : vector<16x1xf32>
    %240 = vector.broadcast %239 : vector<16x1xf32> to vector<16x32xf32>
    %241 = arith.mulf %236, %240 : vector<16x32xf32>
    %242 = vector.broadcast %222 : vector<1x32xf32> to vector<16x32xf32>
    %243 = arith.mulf %241, %242 : vector<16x32xf32>
    %244 = vector.broadcast %223 : vector<1x32xf32> to vector<16x32xf32>
    %245 = arith.addf %243, %244 : vector<16x32xf32>
    %246 = arith.truncf %245 : vector<16x32xf32> to vector<16x32xbf16>
    %c4_77 = arith.constant 4 : index
    %c0_78 = arith.constant 0 : index
    %c0_79 = arith.constant 0 : index
    %247 = vector.load %arg2[%c4_77, %c0_78, %c0_79] : memref<7x64x128xbf16, #tpu.memory_space<vmem>>, vector<1x32x64xbf16>
    %248 = vector.shape_cast %247 : vector<1x32x64xbf16> to vector<32x64xbf16>
    %cst_80 = arith.constant dense<0.000000e+00> : vector<16x64xf32>
    %249 = tpu.matmul %246, %248, %cst_80 {dimension_numbers = #tpu.dot_dimension_numbers<[1], [0], [0], [1], [0, 0, 1, 1], [], []>} : vector<16x32xbf16>, vector<32x64xbf16>, vector<16x64xf32> -> vector<16x64xf32>
    %c15 = arith.constant 15 : index
    %c0_81 = arith.constant 0 : index
    %250 = vector.load %arg4[%c15, %c0_81] : memref<19x128xf32, #tpu.memory_space<vmem>>, vector<1x64xf32>
    %251 = vector.broadcast %250 : vector<1x64xf32> to vector<16x64xf32>
    %252 = arith.addf %249, %251 : vector<16x64xf32>
    %253 = arith.mulf %252, %252 : vector<16x64xf32>
    %254 = arith.mulf %252, %253 : vector<16x64xf32>
    %cst_82 = arith.constant 4.471500e-02 : f32
    %255 = vector.broadcast %cst_82 : f32 to vector<16x64xf32>
    %256 = arith.mulf %255, %254 : vector<16x64xf32>
    %257 = arith.addf %252, %256 : vector<16x64xf32>
    %cst_83 = arith.constant 0.797884583 : f32
    %258 = vector.broadcast %cst_83 : f32 to vector<16x64xf32>
    %259 = arith.mulf %258, %257 : vector<16x64xf32>
    %260 = math.tanh %259 : vector<16x64xf32>
    %cst_84 = arith.constant 1.000000e+00 : f32
    %261 = vector.broadcast %cst_84 : f32 to vector<16x64xf32>
    %262 = arith.addf %261, %260 : vector<16x64xf32>
    %cst_85 = arith.constant 5.000000e-01 : f32
    %263 = vector.broadcast %cst_85 : f32 to vector<16x64xf32>
    %264 = arith.mulf %263, %262 : vector<16x64xf32>
    %265 = arith.mulf %252, %264 : vector<16x64xf32>
    %266 = arith.truncf %265 : vector<16x64xf32> to vector<16x64xbf16>
    %c5_86 = arith.constant 5 : index
    %c0_87 = arith.constant 0 : index
    %c0_88 = arith.constant 0 : index
    %267 = vector.load %arg2[%c5_86, %c0_87, %c0_88] : memref<7x64x128xbf16, #tpu.memory_space<vmem>>, vector<1x64x32xbf16>
    %268 = vector.shape_cast %267 : vector<1x64x32xbf16> to vector<64x32xbf16>
    %cst_89 = arith.constant dense<0.000000e+00> : vector<16x32xf32>
    %269 = tpu.matmul %266, %268, %cst_89 {dimension_numbers = #tpu.dot_dimension_numbers<[1], [0], [0], [1], [0, 0, 1, 1], [], []>} : vector<16x64xbf16>, vector<64x32xbf16>, vector<16x32xf32> -> vector<16x32xf32>
    %c16 = arith.constant 16 : index
    %c0_90 = arith.constant 0 : index
    %270 = vector.load %arg4[%c16, %c0_90] : memref<19x128xf32, #tpu.memory_space<vmem>>, vector<1x32xf32>
    %271 = vector.broadcast %270 : vector<1x32xf32> to vector<16x32xf32>
    %272 = arith.addf %269, %271 : vector<16x32xf32>
    %273 = arith.addf %245, %272 : vector<16x32xf32>
    %c17 = arith.constant 17 : index
    %c0_91 = arith.constant 0 : index
    %274 = vector.load %arg4[%c17, %c0_91] : memref<19x128xf32, #tpu.memory_space<vmem>>, vector<1x32xf32>
    %c18 = arith.constant 18 : index
    %c0_92 = arith.constant 0 : index
    %275 = vector.load %arg4[%c18, %c0_92] : memref<19x128xf32, #tpu.memory_space<vmem>>, vector<1x32xf32>
    %cst_93 = arith.constant dense<0.000000e+00> : vector<16xf32>
    %276 = vector.multi_reduction <add>, %273, %cst_93 [1] : vector<16x32xf32> to vector<16xf32>
    %277 = vector.shape_cast %276 : vector<16xf32> to vector<16x1xf32>
    %cst_94 = arith.constant 3.200000e+01 : f32
    %278 = vector.broadcast %cst_94 : f32 to vector<16x1xf32>
    %279 = arith.divf %277, %278 : vector<16x1xf32>
    %280 = vector.broadcast %279 : vector<16x1xf32> to vector<16x32xf32>
    %281 = arith.subf %273, %280 : vector<16x32xf32>
    %282 = arith.mulf %281, %281 : vector<16x32xf32>
    %cst_95 = arith.constant dense<0.000000e+00> : vector<16xf32>
    %283 = vector.multi_reduction <add>, %282, %cst_95 [1] : vector<16x32xf32> to vector<16xf32>
    %284 = vector.shape_cast %283 : vector<16xf32> to vector<16x1xf32>
    %cst_96 = arith.constant 3.200000e+01 : f32
    %285 = vector.broadcast %cst_96 : f32 to vector<16x1xf32>
    %286 = arith.divf %284, %285 : vector<16x1xf32>
    %287 = vector.broadcast %279 : vector<16x1xf32> to vector<16x32xf32>
    %288 = arith.subf %273, %287 : vector<16x32xf32>
    %cst_97 = arith.constant 9.99999996E-13 : f32
    %289 = vector.broadcast %cst_97 : f32 to vector<16x1xf32>
    %290 = arith.addf %286, %289 : vector<16x1xf32>
    %291 = math.rsqrt %290 : vector<16x1xf32>
    %292 = vector.broadcast %291 : vector<16x1xf32> to vector<16x32xf32>
    %293 = arith.mulf %288, %292 : vector<16x32xf32>
    %294 = vector.broadcast %274 : vector<1x32xf32> to vector<16x32xf32>
    %295 = arith.mulf %293, %294 : vector<16x32xf32>
    %296 = vector.broadcast %275 : vector<1x32xf32> to vector<16x32xf32>
    %297 = arith.addf %295, %296 : vector<16x32xf32>
    %298 = arith.truncf %297 : vector<16x32xf32> to vector<16x32xbf16>
    %c6_98 = arith.constant 6 : index
    %c0_99 = arith.constant 0 : index
    %c0_100 = arith.constant 0 : index
    %299 = vector.load %arg2[%c6_98, %c0_99, %c0_100] : memref<7x64x128xbf16, #tpu.memory_space<vmem>>, vector<1x32x128xbf16>
    %300 = vector.shape_cast %299 : vector<1x32x128xbf16> to vector<32x128xbf16>
    %cst_101 = arith.constant dense<0.000000e+00> : vector<16x128xf32>
    %301 = tpu.matmul %298, %300, %cst_101 {dimension_numbers = #tpu.dot_dimension_numbers<[1], [0], [0], [1], [0, 0, 1, 1], [], []>} : vector<16x32xbf16>, vector<32x128xbf16>, vector<16x128xf32> -> vector<16x128xf32>
    %c2_102 = arith.constant 2 : index
    %c0_103 = arith.constant 0 : index
    %302 = vector.load %arg4[%c2_102, %c0_103] : memref<19x128xf32, #tpu.memory_space<vmem>>, vector<1x128xf32>
    %303 = vector.broadcast %302 : vector<1x128xf32> to vector<16x128xf32>
    %304 = arith.addf %301, %303 : vector<16x128xf32>
    %305 = math.tanh %304 : vector<16x128xf32>
    %c0_104 = arith.constant 0 : index
    %c0_105 = arith.constant 0 : index
    %306 = vector.load %arg5[%c0_104, %c0_105] : memref<16x128xf32, #tpu.memory_space<vmem>>, vector<16x128xf32>
    tpu.vector_store %arg5[%c0_104, %c0_105], %305 {strides = array<i32>} : memref<16x128xf32, #tpu.memory_space<vmem>>, vector<16x128xf32>,
    return
  }
}

</mosaic_0001>

<llo_original>
// kernel: textnet_forward.1
$region0: #{textnet_forward.1}
  #allocation0 [shape = 'u32[]', space=smem, size = 0x4, offset = 0x4, fixed_abs, tag = 'smem constant byte address 0x4 - core index']
  #allocation1 [shape = 'u32[144,128]{1,0:T(1,128)}', space=vmem, size = 0x12000, scoped, tag = 'internal scratch']
  %s0 = inlined_call_operand.vmem [shape: f32[16,32], index: 0, kind: input, shape index: {}]
  %s1 = inlined_call_operand.vmem [shape: f32[4,16,16], index: 1, kind: input, shape index: {}]
  %s2 = inlined_call_operand.vmem [shape: bf16[7,64,128], index: 2, kind: input, shape index: {}]
  %s3 = inlined_call_operand.vmem [shape: bf16[2,4,8,32], index: 3, kind: input, shape index: {}]
  %s4 = inlined_call_operand.vmem [shape: f32[19,128], index: 4, kind: input, shape index: {}]
  %s5 = inlined_call_operand.vmem [shape: f32[16,128], index: 5, kind: output, shape index: {}]
  %s6 = sld [smem:[#allocation0]]
  $region30: #{textnet_forward.1} parent=0
    _
  %s8 = ssub.s32 1, %s6
  %s9 = scalar_select 0, %s8, %s6
  // Predicated region
  $region2: #{textnet_forward.1} parent=0 // pred_check
    _
  $region3: #{textnet_forward.1} parent=0 // pred_check_branch
    %11 = sbr.rel (0) target = $region5
  $region4: #{textnet_forward.1} parent=0 // pred_region
    _
  $region5: #{textnet_forward.1} parent=0 // pred_fallthru
    _
  // Predicated region
  $region6: #{textnet_forward.1} parent=0 // pred_check
    _
  $region7: #{textnet_forward.1} parent=0 // pred_check_branch
    %13 = sbr.rel (0) target = $region9
  $region8: #{textnet_forward.1} parent=0 // pred_region
    _
  $region9: #{textnet_forward.1} parent=0 // pred_fallthru
    _
  // Predicated region
  $region10: #{textnet_forward.1} parent=0 // pred_check
    _
  $region11: #{textnet_forward.1} parent=0 // pred_check_branch
    %15 = sbr.rel (0) target = $region13
  $region12: #{textnet_forward.1} parent=0 // pred_region
    _
  $region13: #{textnet_forward.1} parent=0 // pred_fallthru
    _
  // Predicated region
  $region14: #{textnet_forward.1} parent=0 // pred_check
    _
  $region15: #{textnet_forward.1} parent=0 // pred_check_branch
    %17 = sbr.rel (0) target = $region17
  $region16: #{textnet_forward.1} parent=0 // pred_region
    _
  $region17: #{textnet_forward.1} parent=0 // pred_fallthru
    _
  // Predicated region
  $region18: #{textnet_forward.1} parent=0 // pred_check
    _
  $region19: #{textnet_forward.1} parent=0 // pred_check_branch
    %19 = sbr.rel (0) target = $region21
  $region20: #{textnet_forward.1} parent=0 // pred_region
    _
  $region21: #{textnet_forward.1} parent=0 // pred_fallthru
    _
  %v21 = vld [vmem:[%s0] sm:$0xff]
  %v22 = vld [vmem:[%s0 + $0x8] sm:$0xff]
  %v23 = vld [vmem:[%s4] sm:$0x1]
  %v24 = vld [vmem:[%s4 + $0x1] sm:$0x1]
  %vm25 = vcmask 261120
  %v26 = vsel %vm25, %v21, 0.0
  %27 = vadd.xlane.f32.xlu0 %v26
  %v28 = vpop.xlane.xlu0 %27
  %v29 = vsel %vm25, %v22, 0.0
  %30 = vadd.xlane.f32.xlu0 %v29
  %v31 = vpop.xlane.xlu0 %30
  %v32 = vrcp.pop 32.0
  %v33 = vmul.f32 %v28, %v32
  %v34 = vmul.f32 %v31, %v32
  %v35 = vsub.f32 %v21, %v33
  %v36 = vsub.f32 %v22, %v34
  %v37 = vmul.f32 %v35, %v35
  %v38 = vmul.f32 %v36, %v36
  %v39 = vsel %vm25, %v37, 0.0
  %40 = vadd.xlane.f32.xlu0 %v39
  %v41 = vpop.xlane.xlu0 %40
  %v42 = vsel %vm25, %v38, 0.0
  %43 = vadd.xlane.f32.xlu0 %v42
  %v44 = vpop.xlane.xlu0 %43
  %v45 = vmul.f32 %v41, %v32
  %v46 = vmul.f32 %v44, %v32
  %v47 = vadd.f32 %v45, 1e-12
  %v48 = vadd.f32 %v46, 1e-12
  %v49 = vrsqrt.pop %v47
  %v50 = vrsqrt.pop %v48
  %v51 = vmul.f32 %v35, %v49
  %v52 = vmul.f32 %v36, %v50
  %v53 = vlaneseq
  %v54 = vshrl.u32 %v53, 7
  %v55 = vsub.s32 0, %v54
  %v56 = vrot.slane %v23, %v55
  %v57 = vmul.f32 %v51, %v56
  %v58 = vmul.f32 %v52, %v56
  %v59 = vlaneseq
  %v60 = vshrl.u32 %v59, 7
  %v61 = vsub.s32 0, %v60
  %v62 = vrot.slane %v24, %v61
  %v63 = vadd.f32 %v57, %v62
  %v64 = vadd.f32 %v58, %v62
  %v65 = vld [vmem:[%s1] sm:$0xff]
  %v66 = vld [vmem:[%s1 + $0x8] sm:$0xff]
  %v67 = vld [vmem:[%s1 + $0x10] sm:$0xff]
  %v68 = vld [vmem:[%s1 + $0x18] sm:$0xff]
  %v69 = vld [vmem:[%s1 + $0x20] sm:$0xff]
  %v70 = vld [vmem:[%s1 + $0x28] sm:$0xff]
  %v71 = vld [vmem:[%s1 + $0x30] sm:$0xff]
  %v72 = vld [vmem:[%s1 + $0x38] sm:$0xff]
  %v73 = vpack.c.bf16 %v64, %v63
  %v74 = vld [vmem:[%s2] sm:$0xf]
  %v75 = vld [vmem:[%s2 + $0x4] sm:$0xf]
  %v76 = vld [vmem:[%s2 + $0x8] sm:$0xf]
  %v77 = vld [vmem:[%s2 + $0xc] sm:$0xf]
  %v78 = vld [vmem:[%s4 + $0x3] sm:$0x1]
  %v79 = vlaneseq
  %v80 = vshrl.u32 %v79, 7
  %v81 = vsub.s32 0, %v80
  %v82 = vrot.slane %v78, %v81
  %v87 = vunpack.c.l.b16 %v74
  %v88 = vunpack.c.l.b16 %v75
  %v89 = vunpack.c.l.b16 %v76
  %v90 = vunpack.c.l.b16 %v77
  %v91 = vpack.c.b16 %v88, %v87
  %v92 = vpack.c.b16 %v90, %v89
  %v96 = vsel %vm25, %v73, 0
  %98 = vmatprep.subr.bf16.mxu0 0
  %99 = vmatpush1.bf16.msra.mxu0 %v91
  %100 = vmatprep.subr.bf16.mxu0 0
  %101 = vmatpush1.bf16.msra.mxu0 %v92
  %102 = vmatprep.subr.bf16.mxu0 0
  %103 = vmatpush1.bf16.msra.mxu0 0
  %104 = vmatprep.subr.bf16.mxu0 0
  %105 = vmatpush1.bf16.msra.mxu0 0
  %106 = vmatprep.subr.bf16.mxu0 0
  %107 = vmatpush1.bf16.msra.mxu0 0
  %108 = vmatprep.subr.bf16.mxu0 0
  %109 = vmatpush1.bf16.msra.mxu0 0
  %110 = vmatprep.subr.bf16.mxu0 0
  %111 = vmatpush1.bf16.msra.mxu0 0
  %112 = vmatprep.subr.bf16.mxu0 0
  %113 = vmatpush1.bf16.msra.mxu0 0
  %114 = vmatprep.subr.bf16.mxu0 0
  %115 = vmatpush1.bf16.msra.mxu0 0
  %116 = vmatprep.subr.bf16.mxu0 0
  %117 = vmatpush1.bf16.msra.mxu0 0
  %118 = vmatprep.subr.bf16.mxu0 0
  %119 = vmatpush1.bf16.msra.mxu0 0
  %120 = vmatprep.subr.bf16.mxu0 0
  %121 = vmatpush1.bf16.msra.mxu0 0
  %122 = vmatprep.subr.bf16.mxu0 0
  %123 = vmatpush1.bf16.msra.mxu0 0
  %124 = vmatprep.subr.bf16.mxu0 0
  %125 = vmatpush1.bf16.msra.mxu0 0
  %126 = vmatprep.subr.bf16.mxu0 0
  %127 = vmatpush1.bf16.msra.mxu0 0
  %128 = vmatprep.subr.bf16.mxu0 0
  %129 = vmatpush1.bf16.msra.mxu0 0
  %130 = vmatprep.mubr.bf16.mxu0 0
  %131 = vmatmul.mubr.bf16.gmra.mrb[0].mxu0 %v96
  %v132 = vpop.f32.mrb[0].mxu0
  %v133 = vadd.f32 %v82, %v132
  %v134 = vpop.f32.mrb[0].mxu0
  %v135 = vpop.f32.mrb[0].mxu0
  %v136 = vadd.f32 %v82, %v135
  %v137 = vpop.f32.mrb[0].mxu0
  %138 = vdwg.mxu0
  %141 = vrot.lane.b32.xlu0 %v133, 120
  %v142 = vpop.permute.xlu0 %141
  %143 = vrot.lane.b32.xlu0 %v136, 120
  %v144 = vpop.permute.xlu0 %143
  %147 = vrot.lane.b32.xlu0 %v133, 112
  %v148 = vpop.permute.xlu0 %147
  %149 = vrot.lane.b32.xlu0 %v136, 112
  %v150 = vpop.permute.xlu0 %149
  %153 = vrot.lane.b32.xlu0 %v133, 104
  %v154 = vpop.permute.xlu0 %153
  %155 = vrot.lane.b32.xlu0 %v136, 104
  %v156 = vpop.permute.xlu0 %155
  %v159 = vpack.c.bf16 %v136, %v133
  %v160 = vpack.c.bf16 %v144, %v142
  %v161 = vpack.c.bf16 %v150, %v148
  %v162 = vpack.c.bf16 %v156, %v154
  %164 = vrot.lane.b32.xlu0 %v159, 96
  %v165 = vpop.permute.xlu0 %164
  %vm166 = vcmask 64512
  %v168 = vsel %vm166, %v159, 0
  %v171 = vsel %vm166, %v165, 0
  %173 = vmatprep.subr.bf16.mxu0 0
  %174 = vmatpush1.bf16.xpose.msra.mxu0 %v171
  %175 = vmatprep.subr.bf16.mxu0 0
  %176 = vmatpush1.bf16.xpose.msra.mxu0 0
  %177 = vmatprep.subr.bf16.mxu0 0
  %178 = vmatpush1.bf16.xpose.msra.mxu0 0
  %179 = vmatprep.subr.bf16.mxu0 0
  %180 = vmatpush1.bf16.xpose.msra.mxu0 0
  %181 = vmatprep.subr.bf16.mxu0 0
  %182 = vmatpush1.bf16.xpose.msra.mxu0 0
  %183 = vmatprep.subr.bf16.mxu0 0
  %184 = vmatpush1.bf16.xpose.msra.mxu0 0
  %185 = vmatprep.subr.bf16.mxu0 0
  %186 = vmatpush1.bf16.xpose.msra.mxu0 0
  %187 = vmatprep.subr.bf16.mxu0 0
  %188 = vmatpush1.bf16.xpose.msra.mxu0 0
  %189 = vmatprep.subr.bf16.mxu0 0
  %190 = vmatpush1.bf16.xpose.msra.mxu0 0
  %191 = vmatprep.subr.bf16.mxu0 0
  %192 = vmatpush1.bf16.xpose.msra.mxu0 0
  %193 = vmatprep.subr.bf16.mxu0 0
  %194 = vmatpush1.bf16.xpose.msra.mxu0 0
  %195 = vmatprep.subr.bf16.mxu0 0
  %196 = vmatpush1.bf16.xpose.msra.mxu0 0
  %197 = vmatprep.subr.bf16.mxu0 0
  %198 = vmatpush1.bf16.xpose.msra.mxu0 0
  %199 = vmatprep.subr.bf16.mxu0 0
  %200 = vmatpush1.bf16.xpose.msra.mxu0 0
  %201 = vmatprep.subr.bf16.mxu0 0
  %202 = vmatpush1.bf16.xpose.msra.mxu0 0
  %203 = vmatprep.subr.bf16.mxu0 0
  %204 = vmatpush1.bf16.xpose.msra.mxu0 0
  %205 = vmatprep.mubr.bf16.mxu0 0
  %206 = vmatmul.mubr.bf16.gmra.mrb[0].mxu0 %v168
  %v207 = vpop.f32.mrb[0].mxu0
  %v208 = vadd.f32 %v65, %v207
  %v209 = vpop.f32.mrb[0].mxu0
  %v210 = vpop.f32.mrb[0].mxu0
  %v211 = vadd.f32 %v66, %v210
  %v212 = vpop.f32.mrb[0].mxu0
  %213 = vdwg.mxu0
  %215 = vrot.lane.b32.xlu0 %v160, 96
  %v216 = vpop.permute.xlu0 %215
  %v218 = vsel %vm166, %v160, 0
  %v221 = vsel %vm166, %v216, 0
  %223 = vmatprep.subr.bf16.mxu0 0
  %224 = vmatpush1.bf16.xpose.msra.mxu0 %v221
  %225 = vmatprep.subr.bf16.mxu0 0
  %226 = vmatpush1.bf16.xpose.msra.mxu0 0
  %227 = vmatprep.subr.bf16.mxu0 0
  %228 = vmatpush1.bf16.xpose.msra.mxu0 0
  %229 = vmatprep.subr.bf16.mxu0 0
  %230 = vmatpush1.bf16.xpose.msra.mxu0 0
  %231 = vmatprep.subr.bf16.mxu0 0
  %232 = vmatpush1.bf16.xpose.msra.mxu0 0
  %233 = vmatprep.subr.bf16.mxu0 0
  %234 = vmatpush1.bf16.xpose.msra.mxu0 0
  %235 = vmatprep.subr.bf16.mxu0 0
  %236 = vmatpush1.bf16.xpose.msra.mxu0 0
  %237 = vmatprep.subr.bf16.mxu0 0
  %238 = vmatpush1.bf16.xpose.msra.mxu0 0
  %239 = vmatprep.subr.bf16.mxu0 0
  %240 = vmatpush1.bf16.xpose.msra.mxu0 0
  %241 = vmatprep.subr.bf16.mxu0 0
  %242 = vmatpush1.bf16.xpose.msra.mxu0 0
  %243 = vmatprep.subr.bf16.mxu0 0
  %244 = vmatpush1.bf16.xpose.msra.mxu0 0
  %245 = vmatprep.subr.bf16.mxu0 0
  %246 = vmatpush1.bf16.xpose.msra.mxu0 0
  %247 = vmatprep.subr.bf16.mxu0 0
  %248 = vmatpush1.bf16.xpose.msra.mxu0 0
  %249 = vmatprep.subr.bf16.mxu0 0
  %250 = vmatpush1.bf16.xpose.msra.mxu0 0
  %251 = vmatprep.subr.bf16.mxu0 0
  %252 = vmatpush1.bf16.xpose.msra.mxu0 0
  %253 = vmatprep.subr.bf16.mxu0 0
  %254 = vmatpush1.bf16.xpose.msra.mxu0 0
  %255 = vmatprep.mubr.bf16.mxu0 0
  %256 = vmatmul.mubr.bf16.gmra.mrb[0].mxu0 %v218
  %v257 = vpop.f32.mrb[0].mxu0
  %v258 = vadd.f32 %v67, %v257
  %v259 = vpop.f32.mrb[0].mxu0
  %v260 = vpop.f32.mrb[0].mxu0
  %v261 = vadd.f32 %v68, %v260
  %v262 = vpop.f32.mrb[0].mxu0
  %263 = vdwg.mxu0
  %265 = vrot.lane.b32.xlu0 %v161, 96
  %v266 = vpop.permute.xlu0 %265
  %v268 = vsel %vm166, %v161, 0
  %v271 = vsel %vm166, %v266, 0
  %273 = vmatprep.subr.bf16.mxu0 0
  %274 = vmatpush1.bf16.xpose.msra.mxu0 %v271
  %275 = vmatprep.subr.bf16.mxu0 0
  %276 = vmatpush1.bf16.xpose.msra.mxu0 0
  %277 = vmatprep.subr.bf16.mxu0 0
  %278 = vmatpush1.bf16.xpose.msra.mxu0 0
  %279 = vmatprep.subr.bf16.mxu0 0
  %280 = vmatpush1.bf16.xpose.msra.mxu0 0
  %281 = vmatprep.subr.bf16.mxu0 0
  %282 = vmatpush1.bf16.xpose.msra.mxu0 0
  %283 = vmatprep.subr.bf16.mxu0 0
  %284 = vmatpush1.bf16.xpose.msra.mxu0 0
  %285 = vmatprep.subr.bf16.mxu0 0
  %286 = vmatpush1.bf16.xpose.msra.mxu0 0
  %287 = vmatprep.subr.bf16.mxu0 0
  %288 = vmatpush1.bf16.xpose.msra.mxu0 0
  %289 = vmatprep.subr.bf16.mxu0 0
  %290 = vmatpush1.bf16.xpose.msra.mxu0 0
  %291 = vmatprep.subr.bf16.mxu0 0
  %292 = vmatpush1.bf16.xpose.msra.mxu0 0
  %293 = vmatprep.subr.bf16.mxu0 0
  %294 = vmatpush1.bf16.xpose.msra.mxu0 0
  %295 = vmatprep.subr.bf16.mxu0 0
  %296 = vmatpush1.bf16.xpose.msra.mxu0 0
  %297 = vmatprep.subr.bf16.mxu0 0
  %298 = vmatpush1.bf16.xpose.msra.mxu0 0
  %299 = vmatprep.subr.bf16.mxu0 0
  %300 = vmatpush1.bf16.xpose.msra.mxu0 0
  %301 = vmatprep.subr.bf16.mxu0 0
  %302 = vmatpush1.bf16.xpose.msra.mxu0 0
  %303 = vmatprep.subr.bf16.mxu0 0
  %304 = vmatpush1.bf16.xpose.msra.mxu0 0
  %305 = vmatprep.mubr.bf16.mxu0 0
  %306 = vmatmul.mubr.bf16.gmra.mrb[0].mxu0 %v268
  %v307 = vpop.f32.mrb[0].mxu0
  %v308 = vadd.f32 %v69, %v307
  %v309 = vpop.f32.mrb[0].mxu0
  %v310 = vpop.f32.mrb[0].mxu0
  %v311 = vadd.f32 %v70, %v310
  %v312 = vpop.f32.mrb[0].mxu0
  %313 = vdwg.mxu0
  %315 = vrot.lane.b32.xlu0 %v162, 96
  %v316 = vpop.permute.xlu0 %315
  %v318 = vsel %vm166, %v162, 0
  %v321 = vsel %vm166, %v316, 0
  %323 = vmatprep.subr.bf16.mxu0 0
  %324 = vmatpush1.bf16.xpose.msra.mxu0 %v321
  %325 = vmatprep.subr.bf16.mxu0 0
  %326 = vmatpush1.bf16.xpose.msra.mxu0 0
  %327 = vmatprep.subr.bf16.mxu0 0
  %328 = vmatpush1.bf16.xpose.msra.mxu0 0
  %329 = vmatprep.subr.bf16.mxu0 0
  %330 = vmatpush1.bf16.xpose.msra.mxu0 0
  %331 = vmatprep.subr.bf16.mxu0 0
  %332 = vmatpush1.bf16.xpose.msra.mxu0 0
  %333 = vmatprep.subr.bf16.mxu0 0
  %334 = vmatpush1.bf16.xpose.msra.mxu0 0
  %335 = vmatprep.subr.bf16.mxu0 0
  %336 = vmatpush1.bf16.xpose.msra.mxu0 0
  %337 = vmatprep.subr.bf16.mxu0 0
  %338 = vmatpush1.bf16.xpose.msra.mxu0 0
  %339 = vmatprep.subr.bf16.mxu0 0
  %340 = vmatpush1.bf16.xpose.msra.mxu0 0
  %341 = vmatprep.subr.bf16.mxu0 0
  %342 = vmatpush1.bf16.xpose.msra.mxu0 0
  %343 = vmatprep.subr.bf16.mxu0 0
  %344 = vmatpush1.bf16.xpose.msra.mxu0 0
  %345 = vmatprep.subr.bf16.mxu0 0
  %346 = vmatpush1.bf16.xpose.msra.mxu0 0
  %347 = vmatprep.subr.bf16.mxu0 0
  %348 = vmatpush1.bf16.xpose.msra.mxu0 0
  %349 = vmatprep.subr.bf16.mxu0 0
  %350 = vmatpush1.bf16.xpose.msra.mxu0 0
  %351 = vmatprep.subr.bf16.mxu0 0
  %352 = vmatpush1.bf16.xpose.msra.mxu0 0
  %353 = vmatprep.subr.bf16.mxu0 0
  %354 = vmatpush1.bf16.xpose.msra.mxu0 0
  %355 = vmatprep.mubr.bf16.mxu0 0
  %356 = vmatmul.mubr.bf16.gmra.mrb[0].mxu0 %v318
  %v357 = vpop.f32.mrb[0].mxu0
  %v358 = vadd.f32 %v71, %v357
  %v359 = vpop.f32.mrb[0].mxu0
  %v360 = vpop.f32.mrb[0].mxu0
  %v361 = vadd.f32 %v72, %v360
  %v362 = vpop.f32.mrb[0].mxu0
  %363 = vdwg.mxu0
  %vm364 = vcmask 130048
  %v365 = vsel %vm364, %v208, -inf
  %366 = vmax.xlane.f32.xlu0 %v365
  %v367 = vpop.xlane.xlu0 %366
  %v368 = vsel %vm364, %v211, -inf
  %369 = vmax.xlane.f32.xlu0 %v368
  %v370 = vpop.xlane.xlu0 %369
  %v371 = vsel %vm364, %v258, -inf
  %372 = vmax.xlane.f32.xlu0 %v371
  %v373 = vpop.xlane.xlu0 %372
  %v374 = vsel %vm364, %v261, -inf
  %375 = vmax.xlane.f32.xlu0 %v374
  %v376 = vpop.xlane.xlu0 %375
  %v377 = vsel %vm364, %v308, -inf
  %378 = vmax.xlane.f32.xlu0 %v377
  %v379 = vpop.xlane.xlu0 %378
  %v380 = vsel %vm364, %v311, -inf
  %381 = vmax.xlane.f32.xlu0 %v380
  %v382 = vpop.xlane.xlu0 %381
  %v383 = vsel %vm364, %v358, -inf
  %384 = vmax.xlane.f32.xlu0 %v383
  %v385 = vpop.xlane.xlu0 %384
  %v386 = vsel %vm364, %v361, -inf
  %387 = vmax.xlane.f32.xlu0 %v386
  %v388 = vpop.xlane.xlu0 %387
  %v389 = vsub.f32 %v208, %v367
  %v390 = vsub.f32 %v211, %v370
  %v391 = vsub.f32 %v258, %v373
  %v392 = vsub.f32 %v261, %v376
  %v393 = vsub.f32 %v308, %v379
  %v394 = vsub.f32 %v311, %v382
  %v395 = vsub.f32 %v358, %v385
  %v396 = vsub.f32 %v361, %v388
  %v397 = vmul.f32 %v389, 1.442695
  %v398 = vpow.pop %v397
  %v399 = vmul.f32 %v390, 1.442695
  %v400 = vpow.pop %v399
  %v401 = vmul.f32 %v391, 1.442695
  %v402 = vpow.pop %v401
  %v403 = vmul.f32 %v392, 1.442695
  %v404 = vpow.pop %v403
  %v405 = vmul.f32 %v393, 1.442695
  %v406 = vpow.pop %v405
  %v407 = vmul.f32 %v394, 1.442695
  %v408 = vpow.pop %v407
  %v409 = vmul.f32 %v395, 1.442695
  %v410 = vpow.pop %v409
  %v411 = vmul.f32 %v396, 1.442695
  %v412 = vpow.pop %v411
  %v413 = vsel %vm364, %v398, 0.0
  %414 = vadd.xlane.f32.xlu0 %v413
  %v415 = vpop.xlane.xlu0 %414
  %v416 = vsel %vm364, %v400, 0.0
  %417 = vadd.xlane.f32.xlu0 %v416
  %v418 = vpop.xlane.xlu0 %417
  %v419 = vsel %vm364, %v402, 0.0
  %420 = vadd.xlane.f32.xlu0 %v419
  %v421 = vpop.xlane.xlu0 %420
  %v422 = vsel %vm364, %v404, 0.0
  %423 = vadd.xlane.f32.xlu0 %v422
  %v424 = vpop.xlane.xlu0 %423
  %v425 = vsel %vm364, %v406, 0.0
  %426 = vadd.xlane.f32.xlu0 %v425
  %v427 = vpop.xlane.xlu0 %426
  %v428 = vsel %vm364, %v408, 0.0
  %429 = vadd.xlane.f32.xlu0 %v428
  %v430 = vpop.xlane.xlu0 %429
  %v431 = vsel %vm364, %v410, 0.0
  %432 = vadd.xlane.f32.xlu0 %v431
  %v433 = vpop.xlane.xlu0 %432
  %v434 = vsel %vm364, %v412, 0.0
  %435 = vadd.xlane.f32.xlu0 %v434
  %v436 = vpop.xlane.xlu0 %435
  %v437 = vrcp.pop %v415
  %v438 = vrcp.pop %v418
  %v439 = vrcp.pop %v421
  %v440 = vrcp.pop %v424
  %v441 = vrcp.pop %v427
  %v442 = vrcp.pop %v430
  %v443 = vrcp.pop %v433
  %v444 = vrcp.pop %v436
  %v445 = vmul.f32 %v398, %v437
  %v446 = vmul.f32 %v400, %v438
  %v447 = vmul.f32 %v402, %v439
  %v448 = vmul.f32 %v404, %v440
  %v449 = vmul.f32 %v406, %v441
  %v450 = vmul.f32 %v408, %v442
  %v451 = vmul.f32 %v410, %v443
  %v452 = vmul.f32 %v412, %v444
  %v453 = vpack.c.bf16 %v446, %v445
  %v454 = vpack.c.bf16 %v448, %v447
  %v455 = vpack.c.bf16 %v450, %v449
  %v456 = vpack.c.bf16 %v452, %v451
  %457 = vrot.lane.b32.xlu0 %v159, 64
  %v458 = vpop.permute.xlu0 %457
  %v461 = vsel %vm364, %v453, 0
  %463 = vmatprep.subr.bf16.mxu0 0
  %464 = vmatpush1.bf16.msra.mxu0 %v458
  %465 = vmatprep.subr.bf16.mxu0 0
  %466 = vmatpush1.bf16.msra.mxu0 0
  %467 = vmatprep.subr.bf16.mxu0 0
  %468 = vmatpush1.bf16.msra.mxu0 0
  %469 = vmatprep.subr.bf16.mxu0 0
  %470 = vmatpush1.bf16.msra.mxu0 0
  %471 = vmatprep.subr.bf16.mxu0 0
  %472 = vmatpush1.bf16.msra.mxu0 0
  %473 = vmatprep.subr.bf16.mxu0 0
  %474 = vmatpush1.bf16.msra.mxu0 0
  %475 = vmatprep.subr.bf16.mxu0 0
  %476 = vmatpush1.bf16.msra.mxu0 0
  %477 = vmatprep.subr.bf16.mxu0 0
  %478 = vmatpush1.bf16.msra.mxu0 0
  %479 = vmatprep.subr.bf16.mxu0 0
  %480 = vmatpush1.bf16.msra.mxu0 0
  %481 = vmatprep.subr.bf16.mxu0 0
  %482 = vmatpush1.bf16.msra.mxu0 0
  %483 = vmatprep.subr.bf16.mxu0 0
  %484 = vmatpush1.bf16.msra.mxu0 0
  %485 = vmatprep.subr.bf16.mxu0 0
  %486 = vmatpush1.bf16.msra.mxu0 0
  %487 = vmatprep.subr.bf16.mxu0 0
  %488 = vmatpush1.bf16.msra.mxu0 0
  %489 = vmatprep.subr.bf16.mxu0 0
  %490 = vmatpush1.bf16.msra.mxu0 0
  %491 = vmatprep.subr.bf16.mxu0 0
  %492 = vmatpush1.bf16.msra.mxu0 0
  %493 = vmatprep.subr.bf16.mxu0 0
  %494 = vmatpush1.bf16.msra.mxu0 0
  %495 = vmatprep.mubr.bf16.mxu0 0
  %496 = vmatmul.mubr.bf16.gmra.mrb[0].mxu0 %v461
  %v497 = vpop.f32.mrb[0].mxu0
  %v498 = vadd.f32 0.0, %v497
  %v499 = vpop.f32.mrb[0].mxu0
  %v500 = vpop.f32.mrb[0].mxu0
  %v501 = vadd.f32 0.0, %v500
  %v502 = vpop.f32.mrb[0].mxu0
  %503 = vdwg.mxu0
  %504 = vrot.lane.b32.xlu0 %v160, 64
  %v505 = vpop.permute.xlu0 %504
  %v508 = vsel %vm364, %v454, 0
  %510 = vmatprep.subr.bf16.mxu0 0
  %511 = vmatpush1.bf16.msra.mxu0 %v505
  %512 = vmatprep.subr.bf16.mxu0 0
  %513 = vmatpush1.bf16.msra.mxu0 0
  %514 = vmatprep.subr.bf16.mxu0 0
  %515 = vmatpush1.bf16.msra.mxu0 0
  %516 = vmatprep.subr.bf16.mxu0 0
  %517 = vmatpush1.bf16.msra.mxu0 0
  %518 = vmatprep.subr.bf16.mxu0 0
  %519 = vmatpush1.bf16.msra.mxu0 0
  %520 = vmatprep.subr.bf16.mxu0 0
  %521 = vmatpush1.bf16.msra.mxu0 0
  %522 = vmatprep.subr.bf16.mxu0 0
  %523 = vmatpush1.bf16.msra.mxu0 0
  %524 = vmatprep.subr.bf16.mxu0 0
  %525 = vmatpush1.bf16.msra.mxu0 0
  %526 = vmatprep.subr.bf16.mxu0 0
  %527 = vmatpush1.bf16.msra.mxu0 0
  %528 = vmatprep.subr.bf16.mxu0 0
  %529 = vmatpush1.bf16.msra.mxu0 0
  %530 = vmatprep.subr.bf16.mxu0 0
  %531 = vmatpush1.bf16.msra.mxu0 0
  %532 = vmatprep.subr.bf16.mxu0 0
  %533 = vmatpush1.bf16.msra.mxu0 0
  %534 = vmatprep.subr.bf16.mxu0 0
  %535 = vmatpush1.bf16.msra.mxu0 0
  %536 = vmatprep.subr.bf16.mxu0 0
  %537 = vmatpush1.bf16.msra.mxu0 0
  %538 = vmatprep.subr.bf16.mxu0 0
  %539 = vmatpush1.bf16.msra.mxu0 0
  %540 = vmatprep.subr.bf16.mxu0 0
  %541 = vmatpush1.bf16.msra.mxu0 0
  %542 = vmatprep.mubr.bf16.mxu0 0
  %543 = vmatmul.mubr.bf16.gmra.mrb[0].mxu0 %v508
  %v544 = vpop.f32.mrb[0].mxu0
  %v545 = vadd.f32 0.0, %v544
  %v546 = vpop.f32.mrb[0].mxu0
  %v547 = vpop.f32.mrb[0].mxu0
  %v548 = vadd.f32 0.0, %v547
  %v549 = vpop.f32.mrb[0].mxu0
  %550 = vdwg.mxu0
  %551 = vrot.lane.b32.xlu0 %v161, 64
  %v552 = vpop.permute.xlu0 %551
  %v555 = vsel %vm364, %v455, 0
  %557 = vmatprep.subr.bf16.mxu0 0
  %558 = vmatpush1.bf16.msra.mxu0 %v552
  %559 = vmatprep.subr.bf16.mxu0 0
  %560 = vmatpush1.bf16.msra.mxu0 0
  %561 = vmatprep.subr.bf16.mxu0 0
  %562 = vmatpush1.bf16.msra.mxu0 0
  %563 = vmatprep.subr.bf16.mxu0 0
  %564 = vmatpush1.bf16.msra.mxu0 0
  %565 = vmatprep.subr.bf16.mxu0 0
  %566 = vmatpush1.bf16.msra.mxu0 0
  %567 = vmatprep.subr.bf16.mxu0 0
  %568 = vmatpush1.bf16.msra.mxu0 0
  %569 = vmatprep.subr.bf16.mxu0 0
  %570 = vmatpush1.bf16.msra.mxu0 0
  %571 = vmatprep.subr.bf16.mxu0 0
  %572 = vmatpush1.bf16.msra.mxu0 0
  %573 = vmatprep.subr.bf16.mxu0 0
  %574 = vmatpush1.bf16.msra.mxu0 0
  %575 = vmatprep.subr.bf16.mxu0 0
  %576 = vmatpush1.bf16.msra.mxu0 0
  %577 = vmatprep.subr.bf16.mxu0 0
  %578 = vmatpush1.bf16.msra.mxu0 0
  %579 = vmatprep.subr.bf16.mxu0 0
  %580 = vmatpush1.bf16.msra.mxu0 0
  %581 = vmatprep.subr.bf16.mxu0 0
  %582 = vmatpush1.bf16.msra.mxu0 0
  %583 = vmatprep.subr.bf16.mxu0 0
  %584 = vmatpush1.bf16.msra.mxu0 0
  %585 = vmatprep.subr.bf16.mxu0 0
  %586 = vmatpush1.bf16.msra.mxu0 0
  %587 = vmatprep.subr.bf16.mxu0 0
  %588 = vmatpush1.bf16.msra.mxu0 0
  %589 = vmatprep.mubr.bf16.mxu0 0
  %590 = vmatmul.mubr.bf16.gmra.mrb[0].mxu0 %v555
  %v591 = vpop.f32.mrb[0].mxu0
  %v592 = vadd.f32 0.0, %v591
  %v593 = vpop.f32.mrb[0].mxu0
  %v594 = vpop.f32.mrb[0].mxu0
  %v595 = vadd.f32 0.0, %v594
  %v596 = vpop.f32.mrb[0].mxu0
  %597 = vdwg.mxu0
  %598 = vrot.lane.b32.xlu0 %v162, 64
  %v599 = vpop.permute.xlu0 %598
  %v602 = vsel %vm364, %v456, 0
  %604 = vmatprep.subr.bf16.mxu0 0
  %605 = vmatpush1.bf16.msra.mxu0 %v599
  %606 = vmatprep.subr.bf16.mxu0 0
  %607 = vmatpush1.bf16.msra.mxu0 0
  %608 = vmatprep.subr.bf16.mxu0 0
  %609 = vmatpush1.bf16.msra.mxu0 0
  %610 = vmatprep.subr.bf16.mxu0 0
  %611 = vmatpush1.bf16.msra.mxu0 0
  %612 = vmatprep.subr.bf16.mxu0 0
  %613 = vmatpush1.bf16.msra.mxu0 0
  %614 = vmatprep.subr.bf16.mxu0 0
  %615 = vmatpush1.bf16.msra.mxu0 0
  %616 = vmatprep.subr.bf16.mxu0 0
  %617 = vmatpush1.bf16.msra.mxu0 0
  %618 = vmatprep.subr.bf16.mxu0 0
  %619 = vmatpush1.bf16.msra.mxu0 0
  %620 = vmatprep.subr.bf16.mxu0 0
  %621 = vmatpush1.bf16.msra.mxu0 0
  %622 = vmatprep.subr.bf16.mxu0 0
  %623 = vmatpush1.bf16.msra.mxu0 0
  %624 = vmatprep.subr.bf16.mxu0 0
  %625 = vmatpush1.bf16.msra.mxu0 0
  %626 = vmatprep.subr.bf16.mxu0 0
  %627 = vmatpush1.bf16.msra.mxu0 0
  %628 = vmatprep.subr.bf16.mxu0 0
  %629 = vmatpush1.bf16.msra.mxu0 0
  %630 = vmatprep.subr.bf16.mxu0 0
  %631 = vmatpush1.bf16.msra.mxu0 0
  %632 = vmatprep.subr.bf16.mxu0 0
  %633 = vmatpush1.bf16.msra.mxu0 0
  %634 = vmatprep.subr.bf16.mxu0 0
  %635 = vmatpush1.bf16.msra.mxu0 0
  %636 = vmatprep.mubr.bf16.mxu0 0
  %637 = vmatmul.mubr.bf16.gmra.mrb[0].mxu0 %v602
  %v638 = vpop.f32.mrb[0].mxu0
  %v639 = vadd.f32 0.0, %v638
  %v640 = vpop.f32.mrb[0].mxu0
  %v641 = vpop.f32.mrb[0].mxu0
  %v642 = vadd.f32 0.0, %v641
  %v643 = vpop.f32.mrb[0].mxu0
  %644 = vdwg.mxu0
  %v645 = vpack.c.bf16 %v501, %v498
  %v646 = vpack.c.bf16 %v548, %v545
  %v647 = vpack.c.bf16 %v595, %v592
  %v648 = vpack.c.bf16 %v642, %v639
  %v649 = vld [vmem:[%s3] sm:$0xf]
  %v650 = vld [vmem:[%s3 + $0x4] sm:$0xf]
  %v651 = vld [vmem:[%s3 + $0x8] sm:$0xf]
  %v652 = vld [vmem:[%s3 + $0xc] sm:$0xf]
  %v654 = vsel %vm166, %v645, 0
  %vm656 = vcmask 1043456
  %v658 = vsel %vm656, %v649, 0
  %660 = vmatprep.subr.bf16.mxu0 0
  %661 = vmatpush1.bf16.msra.mxu0 %v658
  %662 = vmatprep.subr.bf16.mxu0 0
  %663 = vmatpush1.bf16.msra.mxu0 0
  %664 = vmatprep.subr.bf16.mxu0 0
  %665 = vmatpush1.bf16.msra.mxu0 0
  %666 = vmatprep.subr.bf16.mxu0 0
  %667 = vmatpush1.bf16.msra.mxu0 0
  %668 = vmatprep.subr.bf16.mxu0 0
  %669 = vmatpush1.bf16.msra.mxu0 0
  %670 = vmatprep.subr.bf16.mxu0 0
  %671 = vmatpush1.bf16.msra.mxu0 0
  %672 = vmatprep.subr.bf16.mxu0 0
  %673 = vmatpush1.bf16.msra.mxu0 0
  %674 = vmatprep.subr.bf16.mxu0 0
  %675 = vmatpush1.bf16.msra.mxu0 0
  %676 = vmatprep.subr.bf16.mxu0 0
  %677 = vmatpush1.bf16.msra.mxu0 0
  %678 = vmatprep.subr.bf16.mxu0 0
  %679 = vmatpush1.bf16.msra.mxu0 0
  %680 = vmatprep.subr.bf16.mxu0 0
  %681 = vmatpush1.bf16.msra.mxu0 0
  %682 = vmatprep.subr.bf16.mxu0 0
  %683 = vmatpush1.bf16.msra.mxu0 0
  %684 = vmatprep.subr.bf16.mxu0 0
  %685 = vmatpush1.bf16.msra.mxu0 0
  %686 = vmatprep.subr.bf16.mxu0 0
  %687 = vmatpush1.bf16.msra.mxu0 0
  %688 = vmatprep.subr.bf16.mxu0 0
  %689 = vmatpush1.bf16.msra.mxu0 0
  %690 = vmatprep.subr.bf16.mxu0 0
  %691 = vmatpush1.bf16.msra.mxu0 0
  %692 = vmatprep.mubr.bf16.mxu0 0
  %693 = vmatmul.mubr.bf16.gmra.mrb[0].mxu0 %v654
  %v694 = vpop.f32.mrb[0].mxu0
  %v695 = vadd.f32 0.0, %v694
  %v696 = vpop.f32.mrb[0].mxu0
  %v697 = vpop.f32.mrb[0].mxu0
  %v698 = vadd.f32 0.0, %v697
  %v699 = vpop.f32.mrb[0].mxu0
  %700 = vdwg.mxu0
  %v702 = vsel %vm166, %v646, 0
  %v705 = vsel %vm656, %v650, 0
  %707 = vmatprep.subr.bf16.mxu0 0
  %708 = vmatpush1.bf16.msra.mxu0 %v705
  %709 = vmatprep.subr.bf16.mxu0 0
  %710 = vmatpush1.bf16.msra.mxu0 0
  %711 = vmatprep.subr.bf16.mxu0 0
  %712 = vmatpush1.bf16.msra.mxu0 0
  %713 = vmatprep.subr.bf16.mxu0 0
  %714 = vmatpush1.bf16.msra.mxu0 0
  %715 = vmatprep.subr.bf16.mxu0 0
  %716 = vmatpush1.bf16.msra.mxu0 0
  %717 = vmatprep.subr.bf16.mxu0 0
  %718 = vmatpush1.bf16.msra.mxu0 0
  %719 = vmatprep.subr.bf16.mxu0 0
  %720 = vmatpush1.bf16.msra.mxu0 0
  %721 = vmatprep.subr.bf16.mxu0 0
  %722 = vmatpush1.bf16.msra.mxu0 0
  %723 = vmatprep.subr.bf16.mxu0 0
  %724 = vmatpush1.bf16.msra.mxu0 0
  %725 = vmatprep.subr.bf16.mxu0 0
  %726 = vmatpush1.bf16.msra.mxu0 0
  %727 = vmatprep.subr.bf16.mxu0 0
  %728 = vmatpush1.bf16.msra.mxu0 0
  %729 = vmatprep.subr.bf16.mxu0 0
  %730 = vmatpush1.bf16.msra.mxu0 0
  %731 = vmatprep.subr.bf16.mxu0 0
  %732 = vmatpush1.bf16.msra.mxu0 0
  %733 = vmatprep.subr.bf16.mxu0 0
  %734 = vmatpush1.bf16.msra.mxu0 0
  %735 = vmatprep.subr.bf16.mxu0 0
  %736 = vmatpush1.bf16.msra.mxu0 0
  %737 = vmatprep.subr.bf16.mxu0 0
  %738 = vmatpush1.bf16.msra.mxu0 0
  %739 = vmatprep.mubr.bf16.mxu0 0
  %740 = vmatmul.mubr.bf16.gmra.mrb[0].mxu0 %v702
  %v741 = vpop.f32.mrb[0].mxu0
  %v742 = vadd.f32 0.0, %v741
  %v743 = vpop.f32.mrb[0].mxu0
  %v744 = vpop.f32.mrb[0].mxu0
  %v745 = vadd.f32 0.0, %v744
  %v746 = vpop.f32.mrb[0].mxu0
  %747 = vdwg.mxu0
  %v749 = vsel %vm166, %v647, 0
  %v752 = vsel %vm656, %v651, 0
  %754 = vmatprep.subr.bf16.mxu0 0
  %755 = vmatpush1.bf16.msra.mxu0 %v752
  %756 = vmatprep.subr.bf16.mxu0 0
  %757 = vmatpush1.bf16.msra.mxu0 0
  %758 = vmatprep.subr.bf16.mxu0 0
  %759 = vmatpush1.bf16.msra.mxu0 0
  %760 = vmatprep.subr.bf16.mxu0 0
  %761 = vmatpush1.bf16.msra.mxu0 0
  %762 = vmatprep.subr.bf16.mxu0 0
  %763 = vmatpush1.bf16.msra.mxu0 0
  %764 = vmatprep.subr.bf16.mxu0 0
  %765 = vmatpush1.bf16.msra.mxu0 0
  %766 = vmatprep.subr.bf16.mxu0 0
  %767 = vmatpush1.bf16.msra.mxu0 0
  %768 = vmatprep.subr.bf16.mxu0 0
  %769 = vmatpush1.bf16.msra.mxu0 0
  %770 = vmatprep.subr.bf16.mxu0 0
  %771 = vmatpush1.bf16.msra.mxu0 0
  %772 = vmatprep.subr.bf16.mxu0 0
  %773 = vmatpush1.bf16.msra.mxu0 0
  %774 = vmatprep.subr.bf16.mxu0 0
  %775 = vmatpush1.bf16.msra.mxu0 0
  %776 = vmatprep.subr.bf16.mxu0 0
  %777 = vmatpush1.bf16.msra.mxu0 0
  %778 = vmatprep.subr.bf16.mxu0 0
  %779 = vmatpush1.bf16.msra.mxu0 0
  %780 = vmatprep.subr.bf16.mxu0 0
  %781 = vmatpush1.bf16.msra.mxu0 0
  %782 = vmatprep.subr.bf16.mxu0 0
  %783 = vmatpush1.bf16.msra.mxu0 0
  %784 = vmatprep.subr.bf16.mxu0 0
  %785 = vmatpush1.bf16.msra.mxu0 0
  %786 = vmatprep.mubr.bf16.mxu0 0
  %787 = vmatmul.mubr.bf16.gmra.mrb[0].mxu0 %v749
  %v788 = vpop.f32.mrb[0].mxu0
  %v789 = vadd.f32 0.0, %v788
  %v790 = vpop.f32.mrb[0].mxu0
  %v791 = vpop.f32.mrb[0].mxu0
  %v792 = vadd.f32 0.0, %v791
  %v793 = vpop.f32.mrb[0].mxu0
  %794 = vdwg.mxu0
  %v796 = vsel %vm166, %v648, 0
  %v799 = vsel %vm656, %v652, 0
  %801 = vmatprep.subr.bf16.mxu0 0
  %802 = vmatpush1.bf16.msra.mxu0 %v799
  %803 = vmatprep.subr.bf16.mxu0 0
  %804 = vmatpush1.bf16.msra.mxu0 0
  %805 = vmatprep.subr.bf16.mxu0 0
  %806 = vmatpush1.bf16.msra.mxu0 0
  %807 = vmatprep.subr.bf16.mxu0 0
  %808 = vmatpush1.bf16.msra.mxu0 0
  %809 = vmatprep.subr.bf16.mxu0 0
  %810 = vmatpush1.bf16.msra.mxu0 0
  %811 = vmatprep.subr.bf16.mxu0 0
  %812 = vmatpush1.bf16.msra.mxu0 0
  %813 = vmatprep.subr.bf16.mxu0 0
  %814 = vmatpush1.bf16.msra.mxu0 0
  %815 = vmatprep.subr.bf16.mxu0 0
  %816 = vmatpush1.bf16.msra.mxu0 0
  %817 = vmatprep.subr.bf16.mxu0 0
  %818 = vmatpush1.bf16.msra.mxu0 0
  %819 = vmatprep.subr.bf16.mxu0 0
  %820 = vmatpush1.bf16.msra.mxu0 0
  %821 = vmatprep.subr.bf16.mxu0 0
  %822 = vmatpush1.bf16.msra.mxu0 0
  %823 = vmatprep.subr.bf16.mxu0 0
  %824 = vmatpush1.bf16.msra.mxu0 0
  %825 = vmatprep.subr.bf16.mxu0 0
  %826 = vmatpush1.bf16.msra.mxu0 0
  %827 = vmatprep.subr.bf16.mxu0 0
  %828 = vmatpush1.bf16.msra.mxu0 0
  %829 = vmatprep.subr.bf16.mxu0 0
  %830 = vmatpush1.bf16.msra.mxu0 0
  %831 = vmatprep.subr.bf16.mxu0 0
  %832 = vmatpush1.bf16.msra.mxu0 0
  %833 = vmatprep.mubr.bf16.mxu0 0
  %834 = vmatmul.mubr.bf16.gmra.mrb[0].mxu0 %v796
  %v835 = vpop.f32.mrb[0].mxu0
  %v836 = vadd.f32 0.0, %v835
  %v837 = vpop.f32.mrb[0].mxu0
  %v838 = vpop.f32.mrb[0].mxu0
  %v839 = vadd.f32 0.0, %v838
  %v840 = vpop.f32.mrb[0].mxu0
  %841 = vdwg.mxu0
  %v842 = vsel %vm25, %v695, 0.0
  %v843 = vsel %vm25, %v742, 0.0
  %v844 = vadd.f32 %v842, %v843
  %v845 = vsel %vm25, %v789, 0.0
  %v846 = vadd.f32 %v844, %v845
  %v847 = vsel %vm25, %v836, 0.0
  %v848 = vadd.f32 %v846, %v847
  %v849 = vsel %vm25, %v698, 0.0
  %v850 = vsel %vm25, %v745, 0.0
  %v851 = vadd.f32 %v849, %v850
  %v852 = vsel %vm25, %v792, 0.0
  %v853 = vadd.f32 %v851, %v852
  %v854 = vsel %vm25, %v839, 0.0
  %v855 = vadd.f32 %v853, %v854
  %v856 = vadd.f32 %v63, %v848
  %v857 = vadd.f32 %v64, %v855
  %v858 = vld [vmem:[%s4 + $0x4] sm:$0x1]
  %v859 = vlaneseq
  %v860 = vshrl.u32 %v859, 7
  %v861 = vsub.s32 0, %v860
  %v862 = vrot.slane %v858, %v861
  %v863 = vadd.f32 %v856, %v862
  %v864 = vadd.f32 %v857, %v862
  %v865 = vld [vmem:[%s4 + $0x5] sm:$0x1]
  %v866 = vld [vmem:[%s4 + $0x6] sm:$0x1]
  %v867 = vsel %vm25, %v863, 0.0
  %868 = vadd.xlane.f32.xlu0 %v867
  %v869 = vpop.xlane.xlu0 %868
  %v870 = vsel %vm25, %v864, 0.0
  %871 = vadd.xlane.f32.xlu0 %v870
  %v872 = vpop.xlane.xlu0 %871
  %v873 = vmul.f32 %v869, %v32
  %v874 = vmul.f32 %v872, %v32
  %v875 = vsub.f32 %v863, %v873
  %v876 = vsub.f32 %v864, %v874
  %v877 = vmul.f32 %v875, %v875
  %v878 = vmul.f32 %v876, %v876
  %v879 = vsel %vm25, %v877, 0.0
  %880 = vadd.xlane.f32.xlu0 %v879
  %v881 = vpop.xlane.xlu0 %880
  %v882 = vsel %vm25, %v878, 0.0
  %883 = vadd.xlane.f32.xlu0 %v882
  %v884 = vpop.xlane.xlu0 %883
  %v885 = vmul.f32 %v881, %v32
  %v886 = vmul.f32 %v884, %v32
  %v887 = vadd.f32 %v885, 1e-12
  %v888 = vadd.f32 %v886, 1e-12
  %v889 = vrsqrt.pop %v887
  %v890 = vrsqrt.pop %v888
  %v891 = vmul.f32 %v875, %v889
  %v892 = vmul.f32 %v876, %v890
  %v893 = vlaneseq
  %v894 = vshrl.u32 %v893, 7
  %v895 = vsub.s32 0, %v894
  %v896 = vrot.slane %v865, %v895
  %v897 = vmul.f32 %v891, %v896
  %v898 = vmul.f32 %v892, %v896
  %v899 = vlaneseq
  %v900 = vshrl.u32 %v899, 7
  %v901 = vsub.s32 0, %v900
  %v902 = vrot.slane %v866, %v901
  %v903 = vadd.f32 %v897, %v902
  %v904 = vadd.f32 %v898, %v902
  %v905 = vpack.c.bf16 %v904, %v903
  %s906 = scalar_lea.vmem %s2, 32
  %v907 = vld [vmem:[%s906] sm:$0xf]
  %v908 = vld [vmem:[%s906 + $0x4] sm:$0xf]
  %v909 = vld [vmem:[%s906 + $0x8] sm:$0xf]
  %v910 = vld [vmem:[%s906 + $0xc] sm:$0xf]
  %v911 = vld [vmem:[%s4 + $0x7] sm:$0x1]
  %v912 = vlaneseq
  %v913 = vshrl.u32 %v912, 7
  %v914 = vsub.s32 0, %v913
  %v915 = vrot.slane %v911, %v914
  %v920 = vunpack.c.l.b16 %v907
  %v921 = vunpack.c.l.b16 %v908
  %v922 = vunpack.c.l.b16 %v909
  %v923 = vunpack.c.l.b16 %v910
  %v924 = vpack.c.b16 %v921, %v920
  %v925 = vpack.c.b16 %v923, %v922
  %v929 = vsel %vm25, %v905, 0
  %931 = vmatprep.subr.bf16.mxu0 0
  %932 = vmatpush1.bf16.msra.mxu0 %v924
  %933 = vmatprep.subr.bf16.mxu0 0
  %934 = vmatpush1.bf16.msra.mxu0 %v925
  %935 = vmatprep.subr.bf16.mxu0 0
  %936 = vmatpush1.bf16.msra.mxu0 0
  %937 = vmatprep.subr.bf16.mxu0 0
  %938 = vmatpush1.bf16.msra.mxu0 0
  %939 = vmatprep.subr.bf16.mxu0 0
  %940 = vmatpush1.bf16.msra.mxu0 0
  %941 = vmatprep.subr.bf16.mxu0 0
  %942 = vmatpush1.bf16.msra.mxu0 0
  %943 = vmatprep.subr.bf16.mxu0 0
  %944 = vmatpush1.bf16.msra.mxu0 0
  %945 = vmatprep.subr.bf16.mxu0 0
  %946 = vmatpush1.bf16.msra.mxu0 0
  %947 = vmatprep.subr.bf16.mxu0 0
  %948 = vmatpush1.bf16.msra.mxu0 0
  %949 = vmatprep.subr.bf16.mxu0 0
  %950 = vmatpush1.bf16.msra.mxu0 0
  %951 = vmatprep.subr.bf16.mxu0 0
  %952 = vmatpush1.bf16.msra.mxu0 0
  %953 = vmatprep.subr.bf16.mxu0 0
  %954 = vmatpush1.bf16.msra.mxu0 0
  %955 = vmatprep.subr.bf16.mxu0 0
  %956 = vmatpush1.bf16.msra.mxu0 0
  %957 = vmatprep.subr.bf16.mxu0 0
  %958 = vmatpush1.bf16.msra.mxu0 0
  %959 = vmatprep.subr.bf16.mxu0 0
  %960 = vmatpush1.bf16.msra.mxu0 0
  %961 = vmatprep.subr.bf16.mxu0 0
  %962 = vmatpush1.bf16.msra.mxu0 0
  %963 = vmatprep.mubr.bf16.mxu0 0
  %964 = vmatmul.mubr.bf16.gmra.mrb[0].mxu0 %v929
  %v965 = vpop.f32.mrb[0].mxu0
  %v966 = vadd.f32 %v915, %v965
  %v967 = vpop.f32.mrb[0].mxu0
  %v968 = vpop.f32.mrb[0].mxu0
  %v969 = vadd.f32 %v915, %v968
  %v970 = vpop.f32.mrb[0].mxu0
  %971 = vdwg.mxu0
  %v972 = vmul.f32 %v966, %v966
  %v973 = vmul.f32 %v969, %v969
  %v974 = vmul.f32 %v966, %v972
  %v975 = vmul.f32 %v969, %v973
  %v976 = vmul.f32 %v974, 0.044715
  %v977 = vmul.f32 %v975, 0.044715
  %v978 = vadd.f32 %v966, %v976
  %v979 = vadd.f32 %v969, %v977
  %v980 = vmul.f32 %v978, 0.7978846
  %v981 = vmul.f32 %v979, 0.7978846
  %v982 = vtanh.pop %v980
  %v983 = vtanh.pop %v981
  %v984 = vadd.f32 %v982, 1.0
  %v985 = vadd.f32 %v983, 1.0
  %v986 = vmul.f32 %v984, 0.5
  %v987 = vmul.f32 %v985, 0.5
  %v988 = vmul.f32 %v966, %v986
  %v989 = vmul.f32 %v969, %v987
  %v990 = vpack.c.bf16 %v989, %v988
  %s991 = scalar_lea.vmem %s2, 64
  %v992 = vld [vmem:[%s991] sm:$0xf]
  %v993 = vld [vmem:[%s991 + $0x4] sm:$0xf]
  %v994 = vld [vmem:[%s991 + $0x8] sm:$0xf]
  %v995 = vld [vmem:[%s991 + $0xc] sm:$0xf]
  %v996 = vld [vmem:[%s991 + $0x10] sm:$0xf]
  %v997 = vld [vmem:[%s991 + $0x14] sm:$0xf]
  %v998 = vld [vmem:[%s991 + $0x18] sm:$0xf]
  %v999 = vld [vmem:[%s991 + $0x1c] sm:$0xf]
  %v1000 = vld [vmem:[%s4 + $0x8] sm:$0x1]
  %v1001 = vlaneseq
  %v1002 = vshrl.u32 %v1001, 7
  %v1003 = vsub.s32 0, %v1002
  %v1004 = vrot.slane %v1000, %v1003
  %v1013 = vunpack.c.l.b16 %v992
  %v1014 = vunpack.c.l.b16 %v993
  %v1015 = vunpack.c.l.b16 %v994
  %v1016 = vunpack.c.l.b16 %v995
  %v1017 = vunpack.c.l.b16 %v996
  %v1018 = vunpack.c.l.b16 %v997
  %v1019 = vunpack.c.l.b16 %v998
  %v1020 = vunpack.c.l.b16 %v999
  %v1021 = vpack.c.b16 %v1014, %v1013
  %v1022 = vpack.c.b16 %v1016, %v1015
  %v1023 = vpack.c.b16 %v1018, %v1017
  %v1024 = vpack.c.b16 %v1020, %v1019
  %vm1029 = vcmask 523264
  %v1031 = vsel %vm1029, %v990, 0
  %1033 = vmatprep.subr.bf16.mxu0 0
  %1034 = vmatpush1.bf16.msra.mxu0 %v1021
  %1035 = vmatprep.subr.bf16.mxu0 0
  %1036 = vmatpush1.bf16.msra.mxu0 %v1022
  %1037 = vmatprep.subr.bf16.mxu0 0
  %1038 = vmatpush1.bf16.msra.mxu0 %v1023
  %1039 = vmatprep.subr.bf16.mxu0 0
  %1040 = vmatpush1.bf16.msra.mxu0 %v1024
  %1041 = vmatprep.subr.bf16.mxu0 0
  %1042 = vmatpush1.bf16.msra.mxu0 0
  %1043 = vmatprep.subr.bf16.mxu0 0
  %1044 = vmatpush1.bf16.msra.mxu0 0
  %1045 = vmatprep.subr.bf16.mxu0 0
  %1046 = vmatpush1.bf16.msra.mxu0 0
  %1047 = vmatprep.subr.bf16.mxu0 0
  %1048 = vmatpush1.bf16.msra.mxu0 0
  %1049 = vmatprep.subr.bf16.mxu0 0
  %1050 = vmatpush1.bf16.msra.mxu0 0
  %1051 = vmatprep.subr.bf16.mxu0 0
  %1052 = vmatpush1.bf16.msra.mxu0 0
  %1053 = vmatprep.subr.bf16.mxu0 0
  %1054 = vmatpush1.bf16.msra.mxu0 0
  %1055 = vmatprep.subr.bf16.mxu0 0
  %1056 = vmatpush1.bf16.msra.mxu0 0
  %1057 = vmatprep.subr.bf16.mxu0 0
  %1058 = vmatpush1.bf16.msra.mxu0 0
  %1059 = vmatprep.subr.bf16.mxu0 0
  %1060 = vmatpush1.bf16.msra.mxu0 0
  %1061 = vmatprep.subr.bf16.mxu0 0
  %1062 = vmatpush1.bf16.msra.mxu0 0
  %1063 = vmatprep.subr.bf16.mxu0 0
  %1064 = vmatpush1.bf16.msra.mxu0 0
  %1065 = vmatprep.mubr.bf16.mxu0 0
  %1066 = vmatmul.mubr.bf16.gmra.mrb[0].mxu0 %v1031
  %v1067 = vpop.f32.mrb[0].mxu0
  %v1068 = vadd.f32 %v1004, %v1067
  %v1069 = vpop.f32.mrb[0].mxu0
  %v1070 = vpop.f32.mrb[0].mxu0
  %v1071 = vadd.f32 %v1004, %v1070
  %v1072 = vpop.f32.mrb[0].mxu0
  %1073 = vdwg.mxu0
  %v1074 = vadd.f32 %v903, %v1068
  %v1075 = vadd.f32 %v904, %v1071
  %v1076 = vld [vmem:[%s4 + $0x9] sm:$0x1]
  %v1077 = vld [vmem:[%s4 + $0xa] sm:$0x1]
  %v1078 = vsel %vm25, %v1074, 0.0
  %1079 = vadd.xlane.f32.xlu0 %v1078
  %v1080 = vpop.xlane.xlu0 %1079
  %v1081 = vsel %vm25, %v1075, 0.0
  %1082 = vadd.xlane.f32.xlu0 %v1081
  %v1083 = vpop.xlane.xlu0 %1082
  %v1084 = vmul.f32 %v1080, %v32
  %v1085 = vmul.f32 %v1083, %v32
  %v1086 = vsub.f32 %v1074, %v1084
  %v1087 = vsub.f32 %v1075, %v1085
  %v1088 = vmul.f32 %v1086, %v1086
  %v1089 = vmul.f32 %v1087, %v1087
  %v1090 = vsel %vm25, %v1088, 0.0
  %1091 = vadd.xlane.f32.xlu0 %v1090
  %v1092 = vpop.xlane.xlu0 %1091
  %v1093 = vsel %vm25, %v1089, 0.0
  %1094 = vadd.xlane.f32.xlu0 %v1093
  %v1095 = vpop.xlane.xlu0 %1094
  %v1096 = vmul.f32 %v1092, %v32
  %v1097 = vmul.f32 %v1095, %v32
  %v1098 = vadd.f32 %v1096, 1e-12
  %v1099 = vadd.f32 %v1097, 1e-12
  %v1100 = vrsqrt.pop %v1098
  %v1101 = vrsqrt.pop %v1099
  %v1102 = vmul.f32 %v1086, %v1100
  %v1103 = vmul.f32 %v1087, %v1101
  %v1104 = vlaneseq
  %v1105 = vshrl.u32 %v1104, 7
  %v1106 = vsub.s32 0, %v1105
  %v1107 = vrot.slane %v1076, %v1106
  %v1108 = vmul.f32 %v1102, %v1107
  %v1109 = vmul.f32 %v1103, %v1107
  %v1110 = vlaneseq
  %v1111 = vshrl.u32 %v1110, 7
  %v1112 = vsub.s32 0, %v1111
  %v1113 = vrot.slane %v1077, %v1112
  %v1114 = vadd.f32 %v1108, %v1113
  %v1115 = vadd.f32 %v1109, %v1113
  %v1116 = vpack.c.bf16 %v1115, %v1114
  %s1117 = scalar_lea.vmem %s2, 96
  %v1118 = vld [vmem:[%s1117] sm:$0xf]
  %v1119 = vld [vmem:[%s1117 + $0x4] sm:$0xf]
  %v1120 = vld [vmem:[%s1117 + $0x8] sm:$0xf]
  %v1121 = vld [vmem:[%s1117 + $0xc] sm:$0xf]
  %v1122 = vld [vmem:[%s4 + $0xb] sm:$0x1]
  %v1123 = vlaneseq
  %v1124 = vshrl.u32 %v1123, 7
  %v1125 = vsub.s32 0, %v1124
  %v1126 = vrot.slane %v1122, %v1125
  %v1131 = vunpack.c.l.b16 %v1118
  %v1132 = vunpack.c.l.b16 %v1119
  %v1133 = vunpack.c.l.b16 %v1120
  %v1134 = vunpack.c.l.b16 %v1121
  %v1135 = vpack.c.b16 %v1132, %v1131
  %v1136 = vpack.c.b16 %v1134, %v1133
  %v1140 = vsel %vm25, %v1116, 0
  %1142 = vmatprep.subr.bf16.mxu0 0
  %1143 = vmatpush1.bf16.msra.mxu0 %v1135
  %1144 = vmatprep.subr.bf16.mxu0 0
  %1145 = vmatpush1.bf16.msra.mxu0 %v1136
  %1146 = vmatprep.subr.bf16.mxu0 0
  %1147 = vmatpush1.bf16.msra.mxu0 0
  %1148 = vmatprep.subr.bf16.mxu0 0
  %1149 = vmatpush1.bf16.msra.mxu0 0
  %1150 = vmatprep.subr.bf16.mxu0 0
  %1151 = vmatpush1.bf16.msra.mxu0 0
  %1152 = vmatprep.subr.bf16.mxu0 0
  %1153 = vmatpush1.bf16.msra.mxu0 0
  %1154 = vmatprep.subr.bf16.mxu0 0
  %1155 = vmatpush1.bf16.msra.mxu0 0
  %1156 = vmatprep.subr.bf16.mxu0 0
  %1157 = vmatpush1.bf16.msra.mxu0 0
  %1158 = vmatprep.subr.bf16.mxu0 0
  %1159 = vmatpush1.bf16.msra.mxu0 0
  %1160 = vmatprep.subr.bf16.mxu0 0
  %1161 = vmatpush1.bf16.msra.mxu0 0
  %1162 = vmatprep.subr.bf16.mxu0 0
  %1163 = vmatpush1.bf16.msra.mxu0 0
  %1164 = vmatprep.subr.bf16.mxu0 0
  %1165 = vmatpush1.bf16.msra.mxu0 0
  %1166 = vmatprep.subr.bf16.mxu0 0
  %1167 = vmatpush1.bf16.msra.mxu0 0
  %1168 = vmatprep.subr.bf16.mxu0 0
  %1169 = vmatpush1.bf16.msra.mxu0 0
  %1170 = vmatprep.subr.bf16.mxu0 0
  %1171 = vmatpush1.bf16.msra.mxu0 0
  %1172 = vmatprep.subr.bf16.mxu0 0
  %1173 = vmatpush1.bf16.msra.mxu0 0
  %1174 = vmatprep.mubr.bf16.mxu0 0
  %1175 = vmatmul.mubr.bf16.gmra.mrb[0].mxu0 %v1140
  %v1176 = vpop.f32.mrb[0].mxu0
  %v1177 = vadd.f32 %v1126, %v1176
  %v1178 = vpop.f32.mrb[0].mxu0
  %v1179 = vpop.f32.mrb[0].mxu0
  %v1180 = vadd.f32 %v1126, %v1179
  %v1181 = vpop.f32.mrb[0].mxu0
  %1182 = vdwg.mxu0
  %1185 = vrot.lane.b32.xlu0 %v1177, 120
  %v1186 = vpop.permute.xlu0 %1185
  %1187 = vrot.lane.b32.xlu0 %v1180, 120
  %v1188 = vpop.permute.xlu0 %1187
  %1191 = vrot.lane.b32.xlu0 %v1177, 112
  %v1192 = vpop.permute.xlu0 %1191
  %1193 = vrot.lane.b32.xlu0 %v1180, 112
  %v1194 = vpop.permute.xlu0 %1193
  %1197 = vrot.lane.b32.xlu0 %v1177, 104
  %v1198 = vpop.permute.xlu0 %1197
  %1199 = vrot.lane.b32.xlu0 %v1180, 104
  %v1200 = vpop.permute.xlu0 %1199
  %v1203 = vpack.c.bf16 %v1180, %v1177
  %v1204 = vpack.c.bf16 %v1188, %v1186
  %v1205 = vpack.c.bf16 %v1194, %v1192
  %v1206 = vpack.c.bf16 %v1200, %v1198
  %1208 = vrot.lane.b32.xlu0 %v1203, 96
  %v1209 = vpop.permute.xlu0 %1208
  %v1211 = vsel %vm166, %v1203, 0
  %v1214 = vsel %vm166, %v1209, 0
  %1216 = vmatprep.subr.bf16.mxu0 0
  %1217 = vmatpush1.bf16.xpose.msra.mxu0 %v1214
  %1218 = vmatprep.subr.bf16.mxu0 0
  %1219 = vmatpush1.bf16.xpose.msra.mxu0 0
  %1220 = vmatprep.subr.bf16.mxu0 0
  %1221 = vmatpush1.bf16.xpose.msra.mxu0 0
  %1222 = vmatprep.subr.bf16.mxu0 0
  %1223 = vmatpush1.bf16.xpose.msra.mxu0 0
  %1224 = vmatprep.subr.bf16.mxu0 0
  %1225 = vmatpush1.bf16.xpose.msra.mxu0 0
  %1226 = vmatprep.subr.bf16.mxu0 0
  %1227 = vmatpush1.bf16.xpose.msra.mxu0 0
  %1228 = vmatprep.subr.bf16.mxu0 0
  %1229 = vmatpush1.bf16.xpose.msra.mxu0 0
  %1230 = vmatprep.subr.bf16.mxu0 0
  %1231 = vmatpush1.bf16.xpose.msra.mxu0 0
  %1232 = vmatprep.subr.bf16.mxu0 0
  %1233 = vmatpush1.bf16.xpose.msra.mxu0 0
  %1234 = vmatprep.subr.bf16.mxu0 0
  %1235 = vmatpush1.bf16.xpose.msra.mxu0 0
  %1236 = vmatprep.subr.bf16.mxu0 0
  %1237 = vmatpush1.bf16.xpose.msra.mxu0 0
  %1238 = vmatprep.subr.bf16.mxu0 0
  %1239 = vmatpush1.bf16.xpose.msra.mxu0 0
  %1240 = vmatprep.subr.bf16.mxu0 0
  %1241 = vmatpush1.bf16.xpose.msra.mxu0 0
  %1242 = vmatprep.subr.bf16.mxu0 0
  %1243 = vmatpush1.bf16.xpose.msra.mxu0 0
  %1244 = vmatprep.subr.bf16.mxu0 0
  %1245 = vmatpush1.bf16.xpose.msra.mxu0 0
  %1246 = vmatprep.subr.bf16.mxu0 0
  %1247 = vmatpush1.bf16.xpose.msra.mxu0 0
  %1248 = vmatprep.mubr.bf16.mxu0 0
  %1249 = vmatmul.mubr.bf16.gmra.mrb[0].mxu0 %v1211
  %v1250 = vpop.f32.mrb[0].mxu0
  %v1251 = vadd.f32 %v65, %v1250
  %v1252 = vpop.f32.mrb[0].mxu0
  %v1253 = vpop.f32.mrb[0].mxu0
  %v1254 = vadd.f32 %v66, %v1253
  %v1255 = vpop.f32.mrb[0].mxu0
  %1256 = vdwg.mxu0
  %1258 = vrot.lane.b32.xlu0 %v1204, 96
  %v1259 = vpop.permute.xlu0 %1258
  %v1261 = vsel %vm166, %v1204, 0
  %v1264 = vsel %vm166, %v1259, 0
  %1266 = vmatprep.subr.bf16.mxu0 0
  %1267 = vmatpush1.bf16.xpose.msra.mxu0 %v1264
  %1268 = vmatprep.subr.bf16.mxu0 0
  %1269 = vmatpush1.bf16.xpose.msra.mxu0 0
  %1270 = vmatprep.subr.bf16.mxu0 0
  %1271 = vmatpush1.bf16.xpose.msra.mxu0 0
  %1272 = vmatprep.subr.bf16.mxu0 0
  %1273 = vmatpush1.bf16.xpose.msra.mxu0 0
  %1274 = vmatprep.subr.bf16.mxu0 0
  %1275 = vmatpush1.bf16.xpose.msra.mxu0 0
  %1276 = vmatprep.subr.bf16.mxu0 0
  %1277 = vmatpush1.bf16.xpose.msra.mxu0 0
  %1278 = vmatprep.subr.bf16.mxu0 0
  %1279 = vmatpush1.bf16.xpose.msra.mxu0 0
  %1280 = vmatprep.subr.bf16.mxu0 0
  %1281 = vmatpush1.bf16.xpose.msra.mxu0 0
  %1282 = vmatprep.subr.bf16.mxu0 0
  %1283 = vmatpush1.bf16.xpose.msra.mxu0 0
  %1284 = vmatprep.subr.bf16.mxu0 0
  %1285 = vmatpush1.bf16.xpose.msra.mxu0 0
  %1286 = vmatprep.subr.bf16.mxu0 0
  %1287 = vmatpush1.bf16.xpose.msra.mxu0 0
  %1288 = vmatprep.subr.bf16.mxu0 0
  %1289 = vmatpush1.bf16.xpose.msra.mxu0 0
  %1290 = vmatprep.subr.bf16.mxu0 0
  %1291 = vmatpush1.bf16.xpose.msra.mxu0 0
  %1292 = vmatprep.subr.bf16.mxu0 0
  %1293 = vmatpush1.bf16.xpose.msra.mxu0 0
  %1294 = vmatprep.subr.bf16.mxu0 0
  %1295 = vmatpush1.bf16.xpose.msra.mxu0 0
  %1296 = vmatprep.subr.bf16.mxu0 0
  %1297 = vmatpush1.bf16.xpose.msra.mxu0 0
  %1298 = vmatprep.mubr.bf16.mxu0 0
  %1299 = vmatmul.mubr.bf16.gmra.mrb[0].mxu0 %v1261
  %v1300 = vpop.f32.mrb[0].mxu0
  %v1301 = vadd.f32 %v67, %v1300
  %v1302 = vpop.f32.mrb[0].mxu0
  %v1303 = vpop.f32.mrb[0].mxu0
  %v1304 = vadd.f32 %v68, %v1303
  %v1305 = vpop.f32.mrb[0].mxu0
  %1306 = vdwg.mxu0
  %1308 = vrot.lane.b32.xlu0 %v1205, 96
  %v1309 = vpop.permute.xlu0 %1308
  %v1311 = vsel %vm166, %v1205, 0
  %v1314 = vsel %vm166, %v1309, 0
  %1316 = vmatprep.subr.bf16.mxu0 0
  %1317 = vmatpush1.bf16.xpose.msra.mxu0 %v1314
  %1318 = vmatprep.subr.bf16.mxu0 0
  %1319 = vmatpush1.bf16.xpose.msra.mxu0 0
  %1320 = vmatprep.subr.bf16.mxu0 0
  %1321 = vmatpush1.bf16.xpose.msra.mxu0 0
  %1322 = vmatprep.subr.bf16.mxu0 0
  %1323 = vmatpush1.bf16.xpose.msra.mxu0 0
  %1324 = vmatprep.subr.bf16.mxu0 0
  %1325 = vmatpush1.bf16.xpose.msra.mxu0 0
  %1326 = vmatprep.subr.bf16.mxu0 0
  %1327 = vmatpush1.bf16.xpose.msra.mxu0 0
  %1328 = vmatprep.subr.bf16.mxu0 0
  %1329 = vmatpush1.bf16.xpose.msra.mxu0 0
  %1330 = vmatprep.subr.bf16.mxu0 0
  %1331 = vmatpush1.bf16.xpose.msra.mxu0 0
  %1332 = vmatprep.subr.bf16.mxu0 0
  %1333 = vmatpush1.bf16.xpose.msra.mxu0 0
  %1334 = vmatprep.subr.bf16.mxu0 0
  %1335 = vmatpush1.bf16.xpose.msra.mxu0 0
  %1336 = vmatprep.subr.bf16.mxu0 0
  %1337 = vmatpush1.bf16.xpose.msra.mxu0 0
  %1338 = vmatprep.subr.bf16.mxu0 0
  %1339 = vmatpush1.bf16.xpose.msra.mxu0 0
  %1340 = vmatprep.subr.bf16.mxu0 0
  %1341 = vmatpush1.bf16.xpose.msra.mxu0 0
  %1342 = vmatprep.subr.bf16.mxu0 0
  %1343 = vmatpush1.bf16.xpose.msra.mxu0 0
  %1344 = vmatprep.subr.bf16.mxu0 0
  %1345 = vmatpush1.bf16.xpose.msra.mxu0 0
  %1346 = vmatprep.subr.bf16.mxu0 0
  %1347 = vmatpush1.bf16.xpose.msra.mxu0 0
  %1348 = vmatprep.mubr.bf16.mxu0 0
  %1349 = vmatmul.mubr.bf16.gmra.mrb[0].mxu0 %v1311
  %v1350 = vpop.f32.mrb[0].mxu0
  %v1351 = vadd.f32 %v69, %v1350
  %v1352 = vpop.f32.mrb[0].mxu0
  %v1353 = vpop.f32.mrb[0].mxu0
  %v1354 = vadd.f32 %v70, %v1353
  %v1355 = vpop.f32.mrb[0].mxu0
  %1356 = vdwg.mxu0
  %1358 = vrot.lane.b32.xlu0 %v1206, 96
  %v1359 = vpop.permute.xlu0 %1358
  %v1361 = vsel %vm166, %v1206, 0
  %v1364 = vsel %vm166, %v1359, 0
  %1366 = vmatprep.subr.bf16.mxu0 0
  %1367 = vmatpush1.bf16.xpose.msra.mxu0 %v1364
  %1368 = vmatprep.subr.bf16.mxu0 0
  %1369 = vmatpush1.bf16.xpose.msra.mxu0 0
  %1370 = vmatprep.subr.bf16.mxu0 0
  %1371 = vmatpush1.bf16.xpose.msra.mxu0 0
  %1372 = vmatprep.subr.bf16.mxu0 0
  %1373 = vmatpush1.bf16.xpose.msra.mxu0 0
  %1374 = vmatprep.subr.bf16.mxu0 0
  %1375 = vmatpush1.bf16.xpose.msra.mxu0 0
  %1376 = vmatprep.subr.bf16.mxu0 0
  %1377 = vmatpush1.bf16.xpose.msra.mxu0 0
  %1378 = vmatprep.subr.bf16.mxu0 0
  %1379 = vmatpush1.bf16.xpose.msra.mxu0 0
  %1380 = vmatprep.subr.bf16.mxu0 0
  %1381 = vmatpush1.bf16.xpose.msra.mxu0 0
  %1382 = vmatprep.subr.bf16.mxu0 0
  %1383 = vmatpush1.bf16.xpose.msra.mxu0 0
  %1384 = vmatprep.subr.bf16.mxu0 0
  %1385 = vmatpush1.bf16.xpose.msra.mxu0 0
  %1386 = vmatprep.subr.bf16.mxu0 0
  %1387 = vmatpush1.bf16.xpose.msra.mxu0 0
  %1388 = vmatprep.subr.bf16.mxu0 0
  %1389 = vmatpush1.bf16.xpose.msra.mxu0 0
  %1390 = vmatprep.subr.bf16.mxu0 0
  %1391 = vmatpush1.bf16.xpose.msra.mxu0 0
  %1392 = vmatprep.subr.bf16.mxu0 0
  %1393 = vmatpush1.bf16.xpose.msra.mxu0 0
  %1394 = vmatprep.subr.bf16.mxu0 0
  %1395 = vmatpush1.bf16.xpose.msra.mxu0 0
  %1396 = vmatprep.subr.bf16.mxu0 0
  %1397 = vmatpush1.bf16.xpose.msra.mxu0 0
  %1398 = vmatprep.mubr.bf16.mxu0 0
  %1399 = vmatmul.mubr.bf16.gmra.mrb[0].mxu0 %v1361
  %v1400 = vpop.f32.mrb[0].mxu0
  %v1401 = vadd.f32 %v71, %v1400
  %v1402 = vpop.f32.mrb[0].mxu0
  %v1403 = vpop.f32.mrb[0].mxu0
  %v1404 = vadd.f32 %v72, %v1403
  %v1405 = vpop.f32.mrb[0].mxu0
  %1406 = vdwg.mxu0
  %v1407 = vsel %vm364, %v1251, -inf
  %1408 = vmax.xlane.f32.xlu0 %v1407
  %v1409 = vpop.xlane.xlu0 %1408
  %v1410 = vsel %vm364, %v1254, -inf
  %1411 = vmax.xlane.f32.xlu0 %v1410
  %v1412 = vpop.xlane.xlu0 %1411
  %v1413 = vsel %vm364, %v1301, -inf
  %1414 = vmax.xlane.f32.xlu0 %v1413
  %v1415 = vpop.xlane.xlu0 %1414
  %v1416 = vsel %vm364, %v1304, -inf
  %1417 = vmax.xlane.f32.xlu0 %v1416
  %v1418 = vpop.xlane.xlu0 %1417
  %v1419 = vsel %vm364, %v1351, -inf
  %1420 = vmax.xlane.f32.xlu0 %v1419
  %v1421 = vpop.xlane.xlu0 %1420
  %v1422 = vsel %vm364, %v1354, -inf
  %1423 = vmax.xlane.f32.xlu0 %v1422
  %v1424 = vpop.xlane.xlu0 %1423
  %v1425 = vsel %vm364, %v1401, -inf
  %1426 = vmax.xlane.f32.xlu0 %v1425
  %v1427 = vpop.xlane.xlu0 %1426
  %v1428 = vsel %vm364, %v1404, -inf
  %1429 = vmax.xlane.f32.xlu0 %v1428
  %v1430 = vpop.xlane.xlu0 %1429
  %v1431 = vsub.f32 %v1251, %v1409
  %v1432 = vsub.f32 %v1254, %v1412
  %v1433 = vsub.f32 %v1301, %v1415
  %v1434 = vsub.f32 %v1304, %v1418
  %v1435 = vsub.f32 %v1351, %v1421
  %v1436 = vsub.f32 %v1354, %v1424
  %v1437 = vsub.f32 %v1401, %v1427
  %v1438 = vsub.f32 %v1404, %v1430
  %v1439 = vmul.f32 %v1431, 1.442695
  %v1440 = vpow.pop %v1439
  %v1441 = vmul.f32 %v1432, 1.442695
  %v1442 = vpow.pop %v1441
  %v1443 = vmul.f32 %v1433, 1.442695
  %v1444 = vpow.pop %v1443
  %v1445 = vmul.f32 %v1434, 1.442695
  %v1446 = vpow.pop %v1445
  %v1447 = vmul.f32 %v1435, 1.442695
  %v1448 = vpow.pop %v1447
  %v1449 = vmul.f32 %v1436, 1.442695
  %v1450 = vpow.pop %v1449
  %v1451 = vmul.f32 %v1437, 1.442695
  %v1452 = vpow.pop %v1451
  %v1453 = vmul.f32 %v1438, 1.442695
  %v1454 = vpow.pop %v1453
  %v1455 = vsel %vm364, %v1440, 0.0
  %1456 = vadd.xlane.f32.xlu0 %v1455
  %v1457 = vpop.xlane.xlu0 %1456
  %v1458 = vsel %vm364, %v1442, 0.0
  %1459 = vadd.xlane.f32.xlu0 %v1458
  %v1460 = vpop.xlane.xlu0 %1459
  %v1461 = vsel %vm364, %v1444, 0.0
  %1462 = vadd.xlane.f32.xlu0 %v1461
  %v1463 = vpop.xlane.xlu0 %1462
  %v1464 = vsel %vm364, %v1446, 0.0
  %1465 = vadd.xlane.f32.xlu0 %v1464
  %v1466 = vpop.xlane.xlu0 %1465
  %v1467 = vsel %vm364, %v1448, 0.0
  %1468 = vadd.xlane.f32.xlu0 %v1467
  %v1469 = vpop.xlane.xlu0 %1468
  %v1470 = vsel %vm364, %v1450, 0.0
  %1471 = vadd.xlane.f32.xlu0 %v1470
  %v1472 = vpop.xlane.xlu0 %1471
  %v1473 = vsel %vm364, %v1452, 0.0
  %1474 = vadd.xlane.f32.xlu0 %v1473
  %v1475 = vpop.xlane.xlu0 %1474
  %v1476 = vsel %vm364, %v1454, 0.0
  %1477 = vadd.xlane.f32.xlu0 %v1476
  %v1478 = vpop.xlane.xlu0 %1477
  %v1479 = vrcp.pop %v1457
  %v1480 = vrcp.pop %v1460
  %v1481 = vrcp.pop %v1463
  %v1482 = vrcp.pop %v1466
  %v1483 = vrcp.pop %v1469
  %v1484 = vrcp.pop %v1472
  %v1485 = vrcp.pop %v1475
  %v1486 = vrcp.pop %v1478
  %v1487 = vmul.f32 %v1440, %v1479
  %v1488 = vmul.f32 %v1442, %v1480
  %v1489 = vmul.f32 %v1444, %v1481
  %v1490 = vmul.f32 %v1446, %v1482
  %v1491 = vmul.f32 %v1448, %v1483
  %v1492 = vmul.f32 %v1450, %v1484
  %v1493 = vmul.f32 %v1452, %v1485
  %v1494 = vmul.f32 %v1454, %v1486
  %v1495 = vpack.c.bf16 %v1488, %v1487
  %v1496 = vpack.c.bf16 %v1490, %v1489
  %v1497 = vpack.c.bf16 %v1492, %v1491
  %v1498 = vpack.c.bf16 %v1494, %v1493
  %1499 = vrot.lane.b32.xlu0 %v1203, 64
  %v1500 = vpop.permute.xlu0 %1499
  %v1503 = vsel %vm364, %v1495, 0
  %1505 = vmatprep.subr.bf16.mxu0 0
  %1506 = vmatpush1.bf16.msra.mxu0 %v1500
  %1507 = vmatprep.subr.bf16.mxu0 0
  %1508 = vmatpush1.bf16.msra.mxu0 0
  %1509 = vmatprep.subr.bf16.mxu0 0
  %1510 = vmatpush1.bf16.msra.mxu0 0
  %1511 = vmatprep.subr.bf16.mxu0 0
  %1512 = vmatpush1.bf16.msra.mxu0 0
  %1513 = vmatprep.subr.bf16.mxu0 0
  %1514 = vmatpush1.bf16.msra.mxu0 0
  %1515 = vmatprep.subr.bf16.mxu0 0
  %1516 = vmatpush1.bf16.msra.mxu0 0
  %1517 = vmatprep.subr.bf16.mxu0 0
  %1518 = vmatpush1.bf16.msra.mxu0 0
  %1519 = vmatprep.subr.bf16.mxu0 0
  %1520 = vmatpush1.bf16.msra.mxu0 0
  %1521 = vmatprep.subr.bf16.mxu0 0
  %1522 = vmatpush1.bf16.msra.mxu0 0
  %1523 = vmatprep.subr.bf16.mxu0 0
  %1524 = vmatpush1.bf16.msra.mxu0 0
  %1525 = vmatprep.subr.bf16.mxu0 0
  %1526 = vmatpush1.bf16.msra.mxu0 0
  %1527 = vmatprep.subr.bf16.mxu0 0
  %1528 = vmatpush1.bf16.msra.mxu0 0
  %1529 = vmatprep.subr.bf16.mxu0 0
  %1530 = vmatpush1.bf16.msra.mxu0 0
  %1531 = vmatprep.subr.bf16.mxu0 0
  %1532 = vmatpush1.bf16.msra.mxu0 0
  %1533 = vmatprep.subr.bf16.mxu0 0
  %1534 = vmatpush1.bf16.msra.mxu0 0
  %1535 = vmatprep.subr.bf16.mxu0 0
  %1536 = vmatpush1.bf16.msra.mxu0 0
  %1537 = vmatprep.mubr.bf16.mxu0 0
  %1538 = vmatmul.mubr.bf16.gmra.mrb[0].mxu0 %v1503
  %v1539 = vpop.f32.mrb[0].mxu0
  %v1540 = vadd.f32 0.0, %v1539
  %v1541 = vpop.f32.mrb[0].mxu0
  %v1542 = vpop.f32.mrb[0].mxu0
  %v1543 = vadd.f32 0.0, %v1542
  %v1544 = vpop.f32.mrb[0].mxu0
  %1545 = vdwg.mxu0
  %1546 = vrot.lane.b32.xlu0 %v1204, 64
  %v1547 = vpop.permute.xlu0 %1546
  %v1550 = vsel %vm364, %v1496, 0
  %1552 = vmatprep.subr.bf16.mxu0 0
  %1553 = vmatpush1.bf16.msra.mxu0 %v1547
  %1554 = vmatprep.subr.bf16.mxu0 0
  %1555 = vmatpush1.bf16.msra.mxu0 0
  %1556 = vmatprep.subr.bf16.mxu0 0
  %1557 = vmatpush1.bf16.msra.mxu0 0
  %1558 = vmatprep.subr.bf16.mxu0 0
  %1559 = vmatpush1.bf16.msra.mxu0 0
  %1560 = vmatprep.subr.bf16.mxu0 0
  %1561 = vmatpush1.bf16.msra.mxu0 0
  %1562 = vmatprep.subr.bf16.mxu0 0
  %1563 = vmatpush1.bf16.msra.mxu0 0
  %1564 = vmatprep.subr.bf16.mxu0 0
  %1565 = vmatpush1.bf16.msra.mxu0 0
  %1566 = vmatprep.subr.bf16.mxu0 0
  %1567 = vmatpush1.bf16.msra.mxu0 0
  %1568 = vmatprep.subr.bf16.mxu0 0
  %1569 = vmatpush1.bf16.msra.mxu0 0
  %1570 = vmatprep.subr.bf16.mxu0 0
  %1571 = vmatpush1.bf16.msra.mxu0 0
  %1572 = vmatprep.subr.bf16.mxu0 0
  %1573 = vmatpush1.bf16.msra.mxu0 0
  %1574 = vmatprep.subr.bf16.mxu0 0
  %1575 = vmatpush1.bf16.msra.mxu0 0
  %1576 = vmatprep.subr.bf16.mxu0 0
  %1577 = vmatpush1.bf16.msra.mxu0 0
  %1578 = vmatprep.subr.bf16.mxu0 0
  %1579 = vmatpush1.bf16.msra.mxu0 0
  %1580 = vmatprep.subr.bf16.mxu0 0
  %1581 = vmatpush1.bf16.msra.mxu0 0
  %1582 = vmatprep.subr.bf16.mxu0 0
  %1583 = vmatpush1.bf16.msra.mxu0 0
  %1584 = vmatprep.mubr.bf16.mxu0 0
  %1585 = vmatmul.mubr.bf16.gmra.mrb[0].mxu0 %v1550
  %v1586 = vpop.f32.mrb[0].mxu0
  %v1587 = vadd.f32 0.0, %v1586
  %v1588 = vpop.f32.mrb[0].mxu0
  %v1589 = vpop.f32.mrb[0].mxu0
  %v1590 = vadd.f32 0.0, %v1589
  %v1591 = vpop.f32.mrb[0].mxu0
  %1592 = vdwg.mxu0
  %1593 = vrot.lane.b32.xlu0 %v1205, 64
  %v1594 = vpop.permute.xlu0 %1593
  %v1597 = vsel %vm364, %v1497, 0
  %1599 = vmatprep.subr.bf16.mxu0 0
  %1600 = vmatpush1.bf16.msra.mxu0 %v1594
  %1601 = vmatprep.subr.bf16.mxu0 0
  %1602 = vmatpush1.bf16.msra.mxu0 0
  %1603 = vmatprep.subr.bf16.mxu0 0
  %1604 = vmatpush1.bf16.msra.mxu0 0
  %1605 = vmatprep.subr.bf16.mxu0 0
  %1606 = vmatpush1.bf16.msra.mxu0 0
  %1607 = vmatprep.subr.bf16.mxu0 0
  %1608 = vmatpush1.bf16.msra.mxu0 0
  %1609 = vmatprep.subr.bf16.mxu0 0
  %1610 = vmatpush1.bf16.msra.mxu0 0
  %1611 = vmatprep.subr.bf16.mxu0 0
  %1612 = vmatpush1.bf16.msra.mxu0 0
  %1613 = vmatprep.subr.bf16.mxu0 0
  %1614 = vmatpush1.bf16.msra.mxu0 0
  %1615 = vmatprep.subr.bf16.mxu0 0
  %1616 = vmatpush1.bf16.msra.mxu0 0
  %1617 = vmatprep.subr.bf16.mxu0 0
  %1618 = vmatpush1.bf16.msra.mxu0 0
  %1619 = vmatprep.subr.bf16.mxu0 0
  %1620 = vmatpush1.bf16.msra.mxu0 0
  %1621 = vmatprep.subr.bf16.mxu0 0
  %1622 = vmatpush1.bf16.msra.mxu0 0
  %1623 = vmatprep.subr.bf16.mxu0 0
  %1624 = vmatpush1.bf16.msra.mxu0 0
  %1625 = vmatprep.subr.bf16.mxu0 0
  %1626 = vmatpush1.bf16.msra.mxu0 0
  %1627 = vmatprep.subr.bf16.mxu0 0
  %1628 = vmatpush1.bf16.msra.mxu0 0
  %1629 = vmatprep.subr.bf16.mxu0 0
  %1630 = vmatpush1.bf16.msra.mxu0 0
  %1631 = vmatprep.mubr.bf16.mxu0 0
  %1632 = vmatmul.mubr.bf16.gmra.mrb[0].mxu0 %v1597
  %v1633 = vpop.f32.mrb[0].mxu0
  %v1634 = vadd.f32 0.0, %v1633
  %v1635 = vpop.f32.mrb[0].mxu0
  %v1636 = vpop.f32.mrb[0].mxu0
  %v1637 = vadd.f32 0.0, %v1636
  %v1638 = vpop.f32.mrb[0].mxu0
  %1639 = vdwg.mxu0
  %1640 = vrot.lane.b32.xlu0 %v1206, 64
  %v1641 = vpop.permute.xlu0 %1640
  %v1644 = vsel %vm364, %v1498, 0
  %1646 = vmatprep.subr.bf16.mxu0 0
  %1647 = vmatpush1.bf16.msra.mxu0 %v1641
  %1648 = vmatprep.subr.bf16.mxu0 0
  %1649 = vmatpush1.bf16.msra.mxu0 0
  %1650 = vmatprep.subr.bf16.mxu0 0
  %1651 = vmatpush1.bf16.msra.mxu0 0
  %1652 = vmatprep.subr.bf16.mxu0 0
  %1653 = vmatpush1.bf16.msra.mxu0 0
  %1654 = vmatprep.subr.bf16.mxu0 0
  %1655 = vmatpush1.bf16.msra.mxu0 0
  %1656 = vmatprep.subr.bf16.mxu0 0
  %1657 = vmatpush1.bf16.msra.mxu0 0
  %1658 = vmatprep.subr.bf16.mxu0 0
  %1659 = vmatpush1.bf16.msra.mxu0 0
  %1660 = vmatprep.subr.bf16.mxu0 0
  %1661 = vmatpush1.bf16.msra.mxu0 0
  %1662 = vmatprep.subr.bf16.mxu0 0
  %1663 = vmatpush1.bf16.msra.mxu0 0
  %1664 = vmatprep.subr.bf16.mxu0 0
  %1665 = vmatpush1.bf16.msra.mxu0 0
  %1666 = vmatprep.subr.bf16.mxu0 0
  %1667 = vmatpush1.bf16.msra.mxu0 0
  %1668 = vmatprep.subr.bf16.mxu0 0
  %1669 = vmatpush1.bf16.msra.mxu0 0
  %1670 = vmatprep.subr.bf16.mxu0 0
  %1671 = vmatpush1.bf16.msra.mxu0 0
  %1672 = vmatprep.subr.bf16.mxu0 0
  %1673 = vmatpush1.bf16.msra.mxu0 0
  %1674 = vmatprep.subr.bf16.mxu0 0
  %1675 = vmatpush1.bf16.msra.mxu0 0
  %1676 = vmatprep.subr.bf16.mxu0 0
  %1677 = vmatpush1.bf16.msra.mxu0 0
  %1678 = vmatprep.mubr.bf16.mxu0 0
  %1679 = vmatmul.mubr.bf16.gmra.mrb[0].mxu0 %v1644
  %v1680 = vpop.f32.mrb[0].mxu0
  %v1681 = vadd.f32 0.0, %v1680
  %v1682 = vpop.f32.mrb[0].mxu0
  %v1683 = vpop.f32.mrb[0].mxu0
  %v1684 = vadd.f32 0.0, %v1683
  %v1685 = vpop.f32.mrb[0].mxu0
  %1686 = vdwg.mxu0
  %v1687 = vpack.c.bf16 %v1543, %v1540
  %v1688 = vpack.c.bf16 %v1590, %v1587
  %v1689 = vpack.c.bf16 %v1637, %v1634
  %v1690 = vpack.c.bf16 %v1684, %v1681
  %s1691 = scalar_lea.vmem %s3, 16
  %v1692 = vld [vmem:[%s1691] sm:$0xf]
  %v1693 = vld [vmem:[%s1691 + $0x4] sm:$0xf]
  %v1694 = vld [vmem:[%s1691 + $0x8] sm:$0xf]
  %v1695 = vld [vmem:[%s1691 + $0xc] sm:$0xf]
  %v1697 = vsel %vm166, %v1687, 0
  %v1700 = vsel %vm656, %v1692, 0
  %1702 = vmatprep.subr.bf16.mxu0 0
  %1703 = vmatpush1.bf16.msra.mxu0 %v1700
  %1704 = vmatprep.subr.bf16.mxu0 0
  %1705 = vmatpush1.bf16.msra.mxu0 0
  %1706 = vmatprep.subr.bf16.mxu0 0
  %1707 = vmatpush1.bf16.msra.mxu0 0
  %1708 = vmatprep.subr.bf16.mxu0 0
  %1709 = vmatpush1.bf16.msra.mxu0 0
  %1710 = vmatprep.subr.bf16.mxu0 0
  %1711 = vmatpush1.bf16.msra.mxu0 0
  %1712 = vmatprep.subr.bf16.mxu0 0
  %1713 = vmatpush1.bf16.msra.mxu0 0
  %1714 = vmatprep.subr.bf16.mxu0 0
  %1715 = vmatpush1.bf16.msra.mxu0 0
  %1716 = vmatprep.subr.bf16.mxu0 0
  %1717 = vmatpush1.bf16.msra.mxu0 0
  %1718 = vmatprep.subr.bf16.mxu0 0
  %1719 = vmatpush1.bf16.msra.mxu0 0
  %1720 = vmatprep.subr.bf16.mxu0 0
  %1721 = vmatpush1.bf16.msra.mxu0 0
  %1722 = vmatprep.subr.bf16.mxu0 0
  %1723 = vmatpush1.bf16.msra.mxu0 0
  %1724 = vmatprep.subr.bf16.mxu0 0
  %1725 = vmatpush1.bf16.msra.mxu0 0
  %1726 = vmatprep.subr.bf16.mxu0 0
  %1727 = vmatpush1.bf16.msra.mxu0 0
  %1728 = vmatprep.subr.bf16.mxu0 0
  %1729 = vmatpush1.bf16.msra.mxu0 0
  %1730 = vmatprep.subr.bf16.mxu0 0
  %1731 = vmatpush1.bf16.msra.mxu0 0
  %1732 = vmatprep.subr.bf16.mxu0 0
  %1733 = vmatpush1.bf16.msra.mxu0 0
  %1734 = vmatprep.mubr.bf16.mxu0 0
  %1735 = vmatmul.mubr.bf16.gmra.mrb[0].mxu0 %v1697
  %v1736 = vpop.f32.mrb[0].mxu0
  %v1737 = vadd.f32 0.0, %v1736
  %v1738 = vpop.f32.mrb[0].mxu0
  %v1739 = vpop.f32.mrb[0].mxu0
  %v1740 = vadd.f32 0.0, %v1739
  %v1741 = vpop.f32.mrb[0].mxu0
  %1742 = vdwg.mxu0
  %v1744 = vsel %vm166, %v1688, 0
  %v1747 = vsel %vm656, %v1693, 0
  %1749 = vmatprep.subr.bf16.mxu0 0
  %1750 = vmatpush1.bf16.msra.mxu0 %v1747
  %1751 = vmatprep.subr.bf16.mxu0 0
  %1752 = vmatpush1.bf16.msra.mxu0 0
  %1753 = vmatprep.subr.bf16.mxu0 0
  %1754 = vmatpush1.bf16.msra.mxu0 0
  %1755 = vmatprep.subr.bf16.mxu0 0
  %1756 = vmatpush1.bf16.msra.mxu0 0
  %1757 = vmatprep.subr.bf16.mxu0 0
  %1758 = vmatpush1.bf16.msra.mxu0 0
  %1759 = vmatprep.subr.bf16.mxu0 0
  %1760 = vmatpush1.bf16.msra.mxu0 0
  %1761 = vmatprep.subr.bf16.mxu0 0
  %1762 = vmatpush1.bf16.msra.mxu0 0
  %1763 = vmatprep.subr.bf16.mxu0 0
  %1764 = vmatpush1.bf16.msra.mxu0 0
  %1765 = vmatprep.subr.bf16.mxu0 0
  %1766 = vmatpush1.bf16.msra.mxu0 0
  %1767 = vmatprep.subr.bf16.mxu0 0
  %1768 = vmatpush1.bf16.msra.mxu0 0
  %1769 = vmatprep.subr.bf16.mxu0 0
  %1770 = vmatpush1.bf16.msra.mxu0 0
  %1771 = vmatprep.subr.bf16.mxu0 0
  %1772 = vmatpush1.bf16.msra.mxu0 0
  %1773 = vmatprep.subr.bf16.mxu0 0
  %1774 = vmatpush1.bf16.msra.mxu0 0
  %1775 = vmatprep.subr.bf16.mxu0 0
  %1776 = vmatpush1.bf16.msra.mxu0 0
  %1777 = vmatprep.subr.bf16.mxu0 0
  %1778 = vmatpush1.bf16.msra.mxu0 0
  %1779 = vmatprep.subr.bf16.mxu0 0
  %1780 = vmatpush1.bf16.msra.mxu0 0
  %1781 = vmatprep.mubr.bf16.mxu0 0
  %1782 = vmatmul.mubr.bf16.gmra.mrb[0].mxu0 %v1744
  %v1783 = vpop.f32.mrb[0].mxu0
  %v1784 = vadd.f32 0.0, %v1783
  %v1785 = vpop.f32.mrb[0].mxu0
  %v1786 = vpop.f32.mrb[0].mxu0
  %v1787 = vadd.f32 0.0, %v1786
  %v1788 = vpop.f32.mrb[0].mxu0
  %1789 = vdwg.mxu0
  %v1791 = vsel %vm166, %v1689, 0
  %v1794 = vsel %vm656, %v1694, 0
  %1796 = vmatprep.subr.bf16.mxu0 0
  %1797 = vmatpush1.bf16.msra.mxu0 %v1794
  %1798 = vmatprep.subr.bf16.mxu0 0
  %1799 = vmatpush1.bf16.msra.mxu0 0
  %1800 = vmatprep.subr.bf16.mxu0 0
  %1801 = vmatpush1.bf16.msra.mxu0 0
  %1802 = vmatprep.subr.bf16.mxu0 0
  %1803 = vmatpush1.bf16.msra.mxu0 0
  %1804 = vmatprep.subr.bf16.mxu0 0
  %1805 = vmatpush1.bf16.msra.mxu0 0
  %1806 = vmatprep.subr.bf16.mxu0 0
  %1807 = vmatpush1.bf16.msra.mxu0 0
  %1808 = vmatprep.subr.bf16.mxu0 0
  %1809 = vmatpush1.bf16.msra.mxu0 0
  %1810 = vmatprep.subr.bf16.mxu0 0
  %1811 = vmatpush1.bf16.msra.mxu0 0
  %1812 = vmatprep.subr.bf16.mxu0 0
  %1813 = vmatpush1.bf16.msra.mxu0 0
  %1814 = vmatprep.subr.bf16.mxu0 0
  %1815 = vmatpush1.bf16.msra.mxu0 0
  %1816 = vmatprep.subr.bf16.mxu0 0
  %1817 = vmatpush1.bf16.msra.mxu0 0
  %1818 = vmatprep.subr.bf16.mxu0 0
  %1819 = vmatpush1.bf16.msra.mxu0 0
  %1820 = vmatprep.subr.bf16.mxu0 0
  %1821 = vmatpush1.bf16.msra.mxu0 0
  %1822 = vmatprep.subr.bf16.mxu0 0
  %1823 = vmatpush1.bf16.msra.mxu0 0
  %1824 = vmatprep.subr.bf16.mxu0 0
  %1825 = vmatpush1.bf16.msra.mxu0 0
  %1826 = vmatprep.subr.bf16.mxu0 0
  %1827 = vmatpush1.bf16.msra.mxu0 0
  %1828 = vmatprep.mubr.bf16.mxu0 0
  %1829 = vmatmul.mubr.bf16.gmra.mrb[0].mxu0 %v1791
  %v1830 = vpop.f32.mrb[0].mxu0
  %v1831 = vadd.f32 0.0, %v1830
  %v1832 = vpop.f32.mrb[0].mxu0
  %v1833 = vpop.f32.mrb[0].mxu0
  %v1834 = vadd.f32 0.0, %v1833
  %v1835 = vpop.f32.mrb[0].mxu0
  %1836 = vdwg.mxu0
  %v1838 = vsel %vm166, %v1690, 0
  %v1841 = vsel %vm656, %v1695, 0
  %1843 = vmatprep.subr.bf16.mxu0 0
  %1844 = vmatpush1.bf16.msra.mxu0 %v1841
  %1845 = vmatprep.subr.bf16.mxu0 0
  %1846 = vmatpush1.bf16.msra.mxu0 0
  %1847 = vmatprep.subr.bf16.mxu0 0
  %1848 = vmatpush1.bf16.msra.mxu0 0
  %1849 = vmatprep.subr.bf16.mxu0 0
  %1850 = vmatpush1.bf16.msra.mxu0 0
  %1851 = vmatprep.subr.bf16.mxu0 0
  %1852 = vmatpush1.bf16.msra.mxu0 0
  %1853 = vmatprep.subr.bf16.mxu0 0
  %1854 = vmatpush1.bf16.msra.mxu0 0
  %1855 = vmatprep.subr.bf16.mxu0 0
  %1856 = vmatpush1.bf16.msra.mxu0 0
  %1857 = vmatprep.subr.bf16.mxu0 0
  %1858 = vmatpush1.bf16.msra.mxu0 0
  %1859 = vmatprep.subr.bf16.mxu0 0
  %1860 = vmatpush1.bf16.msra.mxu0 0
  %1861 = vmatprep.subr.bf16.mxu0 0
  %1862 = vmatpush1.bf16.msra.mxu0 0
  %1863 = vmatprep.subr.bf16.mxu0 0
  %1864 = vmatpush1.bf16.msra.mxu0 0
  %1865 = vmatprep.subr.bf16.mxu0 0
  %1866 = vmatpush1.bf16.msra.mxu0 0
  %1867 = vmatprep.subr.bf16.mxu0 0
  %1868 = vmatpush1.bf16.msra.mxu0 0
  %1869 = vmatprep.subr.bf16.mxu0 0
  %1870 = vmatpush1.bf16.msra.mxu0 0
  %1871 = vmatprep.subr.bf16.mxu0 0
  %1872 = vmatpush1.bf16.msra.mxu0 0
  %1873 = vmatprep.subr.bf16.mxu0 0
  %1874 = vmatpush1.bf16.msra.mxu0 0
  %1875 = vmatprep.mubr.bf16.mxu0 0
  %1876 = vmatmul.mubr.bf16.gmra.mrb[0].mxu0 %v1838
  %v1877 = vpop.f32.mrb[0].mxu0
  %v1878 = vadd.f32 0.0, %v1877
  %v1879 = vpop.f32.mrb[0].mxu0
  %v1880 = vpop.f32.mrb[0].mxu0
  %v1881 = vadd.f32 0.0, %v1880
  %v1882 = vpop.f32.mrb[0].mxu0
  %1883 = vdwg.mxu0
  %v1884 = vsel %vm25, %v1737, 0.0
  %v1885 = vsel %vm25, %v1784, 0.0
  %v1886 = vadd.f32 %v1884, %v1885
  %v1887 = vsel %vm25, %v1831, 0.0
  %v1888 = vadd.f32 %v1886, %v1887
  %v1889 = vsel %vm25, %v1878, 0.0
  %v1890 = vadd.f32 %v1888, %v1889
  %v1891 = vsel %vm25, %v1740, 0.0
  %v1892 = vsel %vm25, %v1787, 0.0
  %v1893 = vadd.f32 %v1891, %v1892
  %v1894 = vsel %vm25, %v1834, 0.0
  %v1895 = vadd.f32 %v1893, %v1894
  %v1896 = vsel %vm25, %v1881, 0.0
  %v1897 = vadd.f32 %v1895, %v1896
  %v1898 = vadd.f32 %v1114, %v1890
  %v1899 = vadd.f32 %v1115, %v1897
  %v1900 = vld [vmem:[%s4 + $0xc] sm:$0x1]
  %v1901 = vlaneseq
  %v1902 = vshrl.u32 %v1901, 7
  %v1903 = vsub.s32 0, %v1902
  %v1904 = vrot.slane %v1900, %v1903
  %v1905 = vadd.f32 %v1898, %v1904
  %v1906 = vadd.f32 %v1899, %v1904
  %v1907 = vld [vmem:[%s4 + $0xd] sm:$0x1]
  %v1908 = vld [vmem:[%s4 + $0xe] sm:$0x1]
  %v1909 = vsel %vm25, %v1905, 0.0
  %1910 = vadd.xlane.f32.xlu0 %v1909
  %v1911 = vpop.xlane.xlu0 %1910
  %v1912 = vsel %vm25, %v1906, 0.0
  %1913 = vadd.xlane.f32.xlu0 %v1912
  %v1914 = vpop.xlane.xlu0 %1913
  %v1915 = vmul.f32 %v1911, %v32
  %v1916 = vmul.f32 %v1914, %v32
  %v1917 = vsub.f32 %v1905, %v1915
  %v1918 = vsub.f32 %v1906, %v1916
  %v1919 = vmul.f32 %v1917, %v1917
  %v1920 = vmul.f32 %v1918, %v1918
  %v1921 = vsel %vm25, %v1919, 0.0
  %1922 = vadd.xlane.f32.xlu0 %v1921
  %v1923 = vpop.xlane.xlu0 %1922
  %v1924 = vsel %vm25, %v1920, 0.0
  %1925 = vadd.xlane.f32.xlu0 %v1924
  %v1926 = vpop.xlane.xlu0 %1925
  %v1927 = vmul.f32 %v1923, %v32
  %v1928 = vmul.f32 %v1926, %v32
  %v1929 = vadd.f32 %v1927, 1e-12
  %v1930 = vadd.f32 %v1928, 1e-12
  %v1931 = vrsqrt.pop %v1929
  %v1932 = vrsqrt.pop %v1930
  %v1933 = vmul.f32 %v1917, %v1931
  %v1934 = vmul.f32 %v1918, %v1932
  %v1935 = vlaneseq
  %v1936 = vshrl.u32 %v1935, 7
  %v1937 = vsub.s32 0, %v1936
  %v1938 = vrot.slane %v1907, %v1937
  %v1939 = vmul.f32 %v1933, %v1938
  %v1940 = vmul.f32 %v1934, %v1938
  %v1941 = vlaneseq
  %v1942 = vshrl.u32 %v1941, 7
  %v1943 = vsub.s32 0, %v1942
  %v1944 = vrot.slane %v1908, %v1943
  %v1945 = vadd.f32 %v1939, %v1944
  %v1946 = vadd.f32 %v1940, %v1944
  %v1947 = vpack.c.bf16 %v1946, %v1945
  %s1948 = scalar_lea.vmem %s2, 128
  %v1949 = vld [vmem:[%s1948] sm:$0xf]
  %v1950 = vld [vmem:[%s1948 + $0x4] sm:$0xf]
  %v1951 = vld [vmem:[%s1948 + $0x8] sm:$0xf]
  %v1952 = vld [vmem:[%s1948 + $0xc] sm:$0xf]
  %v1953 = vld [vmem:[%s4 + $0xf] sm:$0x1]
  %v1954 = vlaneseq
  %v1955 = vshrl.u32 %v1954, 7
  %v1956 = vsub.s32 0, %v1955
  %v1957 = vrot.slane %v1953, %v1956
  %v1962 = vunpack.c.l.b16 %v1949
  %v1963 = vunpack.c.l.b16 %v1950
  %v1964 = vunpack.c.l.b16 %v1951
  %v1965 = vunpack.c.l.b16 %v1952
  %v1966 = vpack.c.b16 %v1963, %v1962
  %v1967 = vpack.c.b16 %v1965, %v1964
  %v1971 = vsel %vm25, %v1947, 0
  %1973 = vmatprep.subr.bf16.mxu0 0
  %1974 = vmatpush1.bf16.msra.mxu0 %v1966
  %1975 = vmatprep.subr.bf16.mxu0 0
  %1976 = vmatpush1.bf16.msra.mxu0 %v1967
  %1977 = vmatprep.subr.bf16.mxu0 0
  %1978 = vmatpush1.bf16.msra.mxu0 0
  %1979 = vmatprep.subr.bf16.mxu0 0
  %1980 = vmatpush1.bf16.msra.mxu0 0
  %1981 = vmatprep.subr.bf16.mxu0 0
  %1982 = vmatpush1.bf16.msra.mxu0 0
  %1983 = vmatprep.subr.bf16.mxu0 0
  %1984 = vmatpush1.bf16.msra.mxu0 0
  %1985 = vmatprep.subr.bf16.mxu0 0
  %1986 = vmatpush1.bf16.msra.mxu0 0
  %1987 = vmatprep.subr.bf16.mxu0 0
  %1988 = vmatpush1.bf16.msra.mxu0 0
  %1989 = vmatprep.subr.bf16.mxu0 0
  %1990 = vmatpush1.bf16.msra.mxu0 0
  %1991 = vmatprep.subr.bf16.mxu0 0
  %1992 = vmatpush1.bf16.msra.mxu0 0
  %1993 = vmatprep.subr.bf16.mxu0 0
  %1994 = vmatpush1.bf16.msra.mxu0 0
  %1995 = vmatprep.subr.bf16.mxu0 0
  %1996 = vmatpush1.bf16.msra.mxu0 0
  %1997 = vmatprep.subr.bf16.mxu0 0
  %1998 = vmatpush1.bf16.msra.mxu0 0
  %1999 = vmatprep.subr.bf16.mxu0 0
  %2000 = vmatpush1.bf16.msra.mxu0 0
  %2001 = vmatprep.subr.bf16.mxu0 0
  %2002 = vmatpush1.bf16.msra.mxu0 0
  %2003 = vmatprep.subr.bf16.mxu0 0
  %2004 = vmatpush1.bf16.msra.mxu0 0
  %2005 = vmatprep.mubr.bf16.mxu0 0
  %2006 = vmatmul.mubr.bf16.gmra.mrb[0].mxu0 %v1971
  %v2007 = vpop.f32.mrb[0].mxu0
  %v2008 = vadd.f32 %v1957, %v2007
  %v2009 = vpop.f32.mrb[0].mxu0
  %v2010 = vpop.f32.mrb[0].mxu0
  %v2011 = vadd.f32 %v1957, %v2010
  %v2012 = vpop.f32.mrb[0].mxu0
  %2013 = vdwg.mxu0
  %v2014 = vmul.f32 %v2008, %v2008
  %v2015 = vmul.f32 %v2011, %v2011
  %v2016 = vmul.f32 %v2008, %v2014
  %v2017 = vmul.f32 %v2011, %v2015
  %v2018 = vmul.f32 %v2016, 0.044715
  %v2019 = vmul.f32 %v2017, 0.044715
  %v2020 = vadd.f32 %v2008, %v2018
  %v2021 = vadd.f32 %v2011, %v2019
  %v2022 = vmul.f32 %v2020, 0.7978846
  %v2023 = vmul.f32 %v2021, 0.7978846
  %v2024 = vtanh.pop %v2022
  %v2025 = vtanh.pop %v2023
  %v2026 = vadd.f32 %v2024, 1.0
  %v2027 = vadd.f32 %v2025, 1.0
  %v2028 = vmul.f32 %v2026, 0.5
  %v2029 = vmul.f32 %v2027, 0.5
  %v2030 = vmul.f32 %v2008, %v2028
  %v2031 = vmul.f32 %v2011, %v2029
  %v2032 = vpack.c.bf16 %v2031, %v2030
  %s2033 = scalar_lea.vmem %s2, 160
  %v2034 = vld [vmem:[%s2033] sm:$0xf]
  %v2035 = vld [vmem:[%s2033 + $0x4] sm:$0xf]
  %v2036 = vld [vmem:[%s2033 + $0x8] sm:$0xf]
  %v2037 = vld [vmem:[%s2033 + $0xc] sm:$0xf]
  %v2038 = vld [vmem:[%s2033 + $0x10] sm:$0xf]
  %v2039 = vld [vmem:[%s2033 + $0x14] sm:$0xf]
  %v2040 = vld [vmem:[%s2033 + $0x18] sm:$0xf]
  %v2041 = vld [vmem:[%s2033 + $0x1c] sm:$0xf]
  %v2042 = vld [vmem:[%s4 + $0x10] sm:$0x1]
  %v2043 = vlaneseq
  %v2044 = vshrl.u32 %v2043, 7
  %v2045 = vsub.s32 0, %v2044
  %v2046 = vrot.slane %v2042, %v2045
  %v2055 = vunpack.c.l.b16 %v2034
  %v2056 = vunpack.c.l.b16 %v2035
  %v2057 = vunpack.c.l.b16 %v2036
  %v2058 = vunpack.c.l.b16 %v2037
  %v2059 = vunpack.c.l.b16 %v2038
  %v2060 = vunpack.c.l.b16 %v2039
  %v2061 = vunpack.c.l.b16 %v2040
  %v2062 = vunpack.c.l.b16 %v2041
  %v2063 = vpack.c.b16 %v2056, %v2055
  %v2064 = vpack.c.b16 %v2058, %v2057
  %v2065 = vpack.c.b16 %v2060, %v2059
  %v2066 = vpack.c.b16 %v2062, %v2061
  %v2072 = vsel %vm1029, %v2032, 0
  %2074 = vmatprep.subr.bf16.mxu0 0
  %2075 = vmatpush1.bf16.msra.mxu0 %v2063
  %2076 = vmatprep.subr.bf16.mxu0 0
  %2077 = vmatpush1.bf16.msra.mxu0 %v2064
  %2078 = vmatprep.subr.bf16.mxu0 0
  %2079 = vmatpush1.bf16.msra.mxu0 %v2065
  %2080 = vmatprep.subr.bf16.mxu0 0
  %2081 = vmatpush1.bf16.msra.mxu0 %v2066
  %2082 = vmatprep.subr.bf16.mxu0 0
  %2083 = vmatpush1.bf16.msra.mxu0 0
  %2084 = vmatprep.subr.bf16.mxu0 0
  %2085 = vmatpush1.bf16.msra.mxu0 0
  %2086 = vmatprep.subr.bf16.mxu0 0
  %2087 = vmatpush1.bf16.msra.mxu0 0
  %2088 = vmatprep.subr.bf16.mxu0 0
  %2089 = vmatpush1.bf16.msra.mxu0 0
  %2090 = vmatprep.subr.bf16.mxu0 0
  %2091 = vmatpush1.bf16.msra.mxu0 0
  %2092 = vmatprep.subr.bf16.mxu0 0
  %2093 = vmatpush1.bf16.msra.mxu0 0
  %2094 = vmatprep.subr.bf16.mxu0 0
  %2095 = vmatpush1.bf16.msra.mxu0 0
  %2096 = vmatprep.subr.bf16.mxu0 0
  %2097 = vmatpush1.bf16.msra.mxu0 0
  %2098 = vmatprep.subr.bf16.mxu0 0
  %2099 = vmatpush1.bf16.msra.mxu0 0
  %2100 = vmatprep.subr.bf16.mxu0 0
  %2101 = vmatpush1.bf16.msra.mxu0 0
  %2102 = vmatprep.subr.bf16.mxu0 0
  %2103 = vmatpush1.bf16.msra.mxu0 0
  %2104 = vmatprep.subr.bf16.mxu0 0
  %2105 = vmatpush1.bf16.msra.mxu0 0
  %2106 = vmatprep.mubr.bf16.mxu0 0
  %2107 = vmatmul.mubr.bf16.gmra.mrb[0].mxu0 %v2072
  %v2108 = vpop.f32.mrb[0].mxu0
  %v2109 = vadd.f32 %v2046, %v2108
  %v2110 = vpop.f32.mrb[0].mxu0
  %v2111 = vpop.f32.mrb[0].mxu0
  %v2112 = vadd.f32 %v2046, %v2111
  %v2113 = vpop.f32.mrb[0].mxu0
  %2114 = vdwg.mxu0
  %v2115 = vadd.f32 %v1945, %v2109
  %v2116 = vadd.f32 %v1946, %v2112
  %v2117 = vld [vmem:[%s4 + $0x11] sm:$0x1]
  %v2118 = vld [vmem:[%s4 + $0x12] sm:$0x1]
  %v2119 = vsel %vm25, %v2115, 0.0
  %2120 = vadd.xlane.f32.xlu0 %v2119
  %v2121 = vpop.xlane.xlu0 %2120
  %v2122 = vsel %vm25, %v2116, 0.0
  %2123 = vadd.xlane.f32.xlu0 %v2122
  %v2124 = vpop.xlane.xlu0 %2123
  %v2125 = vmul.f32 %v2121, %v32
  %v2126 = vmul.f32 %v2124, %v32
  %v2127 = vsub.f32 %v2115, %v2125
  %v2128 = vsub.f32 %v2116, %v2126
  %v2129 = vmul.f32 %v2127, %v2127
  %v2130 = vmul.f32 %v2128, %v2128
  %v2131 = vsel %vm25, %v2129, 0.0
  %2132 = vadd.xlane.f32.xlu0 %v2131
  %v2133 = vpop.xlane.xlu0 %2132
  %v2134 = vsel %vm25, %v2130, 0.0
  %2135 = vadd.xlane.f32.xlu0 %v2134
  %v2136 = vpop.xlane.xlu0 %2135
  %v2137 = vmul.f32 %v2133, %v32
  %v2138 = vmul.f32 %v2136, %v32
  %v2139 = vadd.f32 %v2137, 1e-12
  %v2140 = vadd.f32 %v2138, 1e-12
  %v2141 = vrsqrt.pop %v2139
  %v2142 = vrsqrt.pop %v2140
  %v2143 = vmul.f32 %v2127, %v2141
  %v2144 = vmul.f32 %v2128, %v2142
  %v2145 = vlaneseq
  %v2146 = vshrl.u32 %v2145, 7
  %v2147 = vsub.s32 0, %v2146
  %v2148 = vrot.slane %v2117, %v2147
  %v2149 = vmul.f32 %v2143, %v2148
  %v2150 = vmul.f32 %v2144, %v2148
  %v2151 = vlaneseq
  %v2152 = vshrl.u32 %v2151, 7
  %v2153 = vsub.s32 0, %v2152
  %v2154 = vrot.slane %v2118, %v2153
  %v2155 = vadd.f32 %v2149, %v2154
  %v2156 = vadd.f32 %v2150, %v2154
  %v2157 = vpack.c.bf16 %v2156, %v2155
  %s2158 = scalar_lea.vmem %s2, 192
  %v2159 = vld [vmem:[%s2158] sm:$0xf]
  %v2160 = vld [vmem:[%s2158 + $0x4] sm:$0xf]
  %v2161 = vld [vmem:[%s2158 + $0x8] sm:$0xf]
  %v2162 = vld [vmem:[%s2158 + $0xc] sm:$0xf]
  %v2163 = vld [vmem:[%s4 + $0x2] sm:$0x1]
  %v2164 = vlaneseq
  %v2165 = vshrl.u32 %v2164, 7
  %v2166 = vsub.s32 0, %v2165
  %v2167 = vrot.slane %v2163, %v2166
  %v2172 = vunpack.c.l.b16 %v2159
  %v2173 = vunpack.c.l.b16 %v2160
  %v2174 = vunpack.c.l.b16 %v2161
  %v2175 = vunpack.c.l.b16 %v2162
  %v2176 = vpack.c.b16 %v2173, %v2172
  %v2177 = vpack.c.b16 %v2175, %v2174
  %v2181 = vsel %vm25, %v2157, 0
  %2183 = vmatprep.subr.bf16.mxu0 0
  %2184 = vmatpush1.bf16.msra.mxu0 %v2176
  %2185 = vmatprep.subr.bf16.mxu0 0
  %2186 = vmatpush1.bf16.msra.mxu0 %v2177
  %2187 = vmatprep.subr.bf16.mxu0 0
  %2188 = vmatpush1.bf16.msra.mxu0 0
  %2189 = vmatprep.subr.bf16.mxu0 0
  %2190 = vmatpush1.bf16.msra.mxu0 0
  %2191 = vmatprep.subr.bf16.mxu0 0
  %2192 = vmatpush1.bf16.msra.mxu0 0
  %2193 = vmatprep.subr.bf16.mxu0 0
  %2194 = vmatpush1.bf16.msra.mxu0 0
  %2195 = vmatprep.subr.bf16.mxu0 0
  %2196 = vmatpush1.bf16.msra.mxu0 0
  %2197 = vmatprep.subr.bf16.mxu0 0
  %2198 = vmatpush1.bf16.msra.mxu0 0
  %2199 = vmatprep.subr.bf16.mxu0 0
  %2200 = vmatpush1.bf16.msra.mxu0 0
  %2201 = vmatprep.subr.bf16.mxu0 0
  %2202 = vmatpush1.bf16.msra.mxu0 0
  %2203 = vmatprep.subr.bf16.mxu0 0
  %2204 = vmatpush1.bf16.msra.mxu0 0
  %2205 = vmatprep.subr.bf16.mxu0 0
  %2206 = vmatpush1.bf16.msra.mxu0 0
  %2207 = vmatprep.subr.bf16.mxu0 0
  %2208 = vmatpush1.bf16.msra.mxu0 0
  %2209 = vmatprep.subr.bf16.mxu0 0
  %2210 = vmatpush1.bf16.msra.mxu0 0
  %2211 = vmatprep.subr.bf16.mxu0 0
  %2212 = vmatpush1.bf16.msra.mxu0 0
  %2213 = vmatprep.subr.bf16.mxu0 0
  %2214 = vmatpush1.bf16.msra.mxu0 0
  %2215 = vmatprep.mubr.bf16.mxu0 0
  %2216 = vmatmul.mubr.bf16.gmra.mrb[0].mxu0 %v2181
  %v2217 = vpop.f32.mrb[0].mxu0
  %v2218 = vadd.f32 %v2167, %v2217
  %v2219 = vpop.f32.mrb[0].mxu0
  %v2220 = vpop.f32.mrb[0].mxu0
  %v2221 = vadd.f32 %v2167, %v2220
  %v2222 = vpop.f32.mrb[0].mxu0
  %2223 = vdwg.mxu0
  %v2224 = vtanh.pop %v2218
  %v2225 = vtanh.pop %v2221
  %2226 = vst [vmem:[%s5] sm:$0xff] %v2224
  %2227 = vst [vmem:[%s5 + $0x8] sm:$0xff] %v2225
  // Predicated region
  $region22: #{textnet_forward.1} parent=0 // pred_check
    _
  $region23: #{textnet_forward.1} parent=0 // pred_check_branch
    %2229 = sbr.rel (0) target = $region25
  $region24: #{textnet_forward.1} parent=0 // pred_region
    _
  $region25: #{textnet_forward.1} parent=0 // pred_fallthru
    _
  // Predicated region
  $region26: #{textnet_forward.1} parent=0 // pred_check
    _
  $region27: #{textnet_forward.1} parent=0 // pred_check_branch
    %2231 = sbr.rel (0) target = $region29
  $region28: #{textnet_forward.1} parent=0 // pred_region
    _
  $region29: #{textnet_forward.1} parent=0 // pred_fallthru
    _

</llo_original>
